<compile_context>
chip_gen: v5e
topology: v5e:2x2
jax: 0.10.0
libtpu: 0.0.40
codegen_flags: <defaults>
</compile_context>

<pallas_src>
import jax
import jax.numpy as jnp
from jax.experimental import pallas as pl
from jax.experimental.pallas import tpu as pltpu

H = W = 7                 # spatial size
HP = WP = 9               # zero-padded spatial size for the 3x3 conv
NPIX = H * W              # 49 valid spatial positions
ROWS = HP * WP            # 81 rows of the padded row-major (9x9) layout
C_IN = 1152
C_MID = 128
C_OUT = 32
KK = 9                    # 3x3 taps
EPS = 1e-5
INV_N = 1.0 / NPIX

MARGIN = 8                # sublane-aligned top margin of the padded scratch
OUT_BASE = 9              # im2col output row i <-> padded 9x9 row (i + OUT_BASE)
M2 = 64                   # im2col rows (padded rows 9..72; kept pixels are 10..70)
ZPAD_ROWS = 96            # >= MARGIN + OUT_BASE + 10 + M2 - 1 = 90, multiple of 8


def fused_kernel(x_ref, w1_ref, g1_ref, b1_ref, g2_ref, b2_ref, w2_ref,
                 o_ref, zpad_ref, zcat_ref):
    # ---- BatchNorm2d(1152): one-pass batch stats over 49 pixels, folded affine, ReLU ----
    x = x_ref[...]                                            # (49, 1152) f32
    s1 = jnp.sum(x, axis=0, keepdims=True)
    s2 = jnp.sum(x * x, axis=0, keepdims=True)
    mean1 = s1 * INV_N
    var1 = s2 * INV_N - mean1 * mean1
    a1 = g1_ref[...] * jax.lax.rsqrt(var1 + EPS)              # (1, 1152)
    c1 = b1_ref[...] - mean1 * a1
    # re-read x from VMEM for the affine so the reduction pass keeps only the
    # two (1,1152) accumulators live (no spill of a 56-vreg centered tensor)
    y = jnp.maximum(x_ref[...] * a1 + c1, 0.0).astype(jnp.bfloat16)

    # ---- Conv2d 1x1 (1152 -> 128): one bf16 MXU matmul, f32 accumulation ----
    z = jnp.dot(y, w1_ref[...], preferred_element_type=jnp.float32)   # (49, 128)

    # ---- BatchNorm2d(128): one-pass batch stats, folded affine, ReLU (stays in vregs) ----
    t1 = jnp.sum(z, axis=0, keepdims=True)
    t2 = jnp.sum(z * z, axis=0, keepdims=True)
    mean2 = t1 * INV_N
    var2 = t2 * INV_N - mean2 * mean2
    a2 = g2_ref[...] * jax.lax.rsqrt(var2 + EPS)               # (1, 128)
    c2 = b2_ref[...] - mean2 * a2
    z2 = jnp.maximum(z * a2 + c2, 0.0)                         # (49, 128) f32

    # ---- scatter the 7x7 block into the zero-padded 9x9 row-major layout ----
    # Only the 81 rows of the padded 9x9 are zeroed; rows outside feed output
    # rows the wrapper discards (documented invariant above).
    zpad_ref[MARGIN:MARGIN + ROWS, :] = jnp.zeros((ROWS, C_MID), jnp.float32)
    for h in range(H):
        r0 = MARGIN + (h + 1) * WP + 1
        zpad_ref[r0:r0 + W, :] = z2[h * W:(h + 1) * W, :]

    # ---- Conv2d 3x3 (128 -> 32): stack the 9 shifted 64-row windows along lanes
    #      (bf16, lane-group-aligned stores) and run ONE deep matmul
    #      (64, 9*128) x (9*128, 32). ----
    k = 0
    for dh in (-1, 0, 1):
        for dw in (-1, 0, 1):
            s = MARGIN + OUT_BASE + dh * WP + dw
            zcat_ref[:, k * C_MID:(k + 1) * C_MID] = \
                zpad_ref[s:s + M2, :].astype(jnp.bfloat16)
            k += 1
    o_ref[...] = jnp.dot(zcat_ref[...], w2_ref[...],
                         preferred_element_type=jnp.float32)   # (64, 32)
    # rows of o_ref not mapping to the 7x7 interior are don't-care


@jax.jit
def run_module(x_nchw, w1, g1, b1, g2, b2, w2):
    # x_nchw: (1, 1152, 7, 7); conv weights in PyTorch OIHW layout
    # NCHW -> (49, 1152): pixels along sublanes, channels along lanes
    x_rows = jnp.transpose(x_nchw.reshape(C_IN, H * W), (1, 0))

    # 1x1 conv weight (128, 1152, 1, 1) -> (1152, 128) bf16
    w1_mat = jnp.transpose(w1[:, :, 0, 0], (1, 0)).astype(jnp.bfloat16)

    # 3x3 conv weight (32, 128, 3, 3) -> (9*128, 32) bf16, tap-major / channel-minor,
    # matching the (dh, dw) order of the lane-stacked windows in the kernel.
    w2_mat = jnp.transpose(w2, (2, 3, 1, 0)).reshape(KK * C_MID, C_OUT) \
                .astype(jnp.bfloat16)

    out_rows = pl.pallas_call(
        fused_kernel,
        out_shape=jax.ShapeDtypeStruct((M2, C_OUT), jnp.float32),
        in_specs=[pl.BlockSpec(memory_space=pltpu.MemorySpace.VMEM)] * 7,
        out_specs=pl.BlockSpec(memory_space=pltpu.MemorySpace.VMEM),
        scratch_shapes=[
            pltpu.VMEM((ZPAD_ROWS, C_MID), jnp.float32),       # zero-padded 9x9 rows
            pltpu.VMEM((M2, KK * C_MID), jnp.bfloat16),        # 9 windows, lane-stacked
        ],
    )(x_rows, w1_mat,
      g1.reshape(1, C_IN), b1.reshape(1, C_IN),
      g2.reshape(1, C_MID), b2.reshape(1, C_MID),
      w2_mat)

    # out_rows row i <-> padded 9x9 row (i + OUT_BASE); pixel (h, w) lives at
    # padded row 9h + w + 10 = (out_rows index 9h + w + 1)
    out = out_rows[1:].reshape(H, WP, C_OUT)[:, :W, :]         # (7, 7, 32)
    return jnp.transpose(out, (2, 0, 1))[None]                 # (1, 32, 7, 7)


def reference(x, w1, g1, b1, g2, b2, w2):
    """Pure-JAX reference matching the PyTorch training-mode forward."""
    def bn(t, g, b):
        mean = jnp.mean(t, axis=(0, 2, 3), keepdims=True)
        var = jnp.mean((t - mean) ** 2, axis=(0, 2, 3), keepdims=True)
        return (t - mean) / jnp.sqrt(var + EPS) * g.reshape(1, -1, 1, 1) \
            + b.reshape(1, -1, 1, 1)

    dn = ('NCHW', 'OIHW', 'NCHW')
    y = jax.nn.relu(bn(x, g1, b1))
    z = jax.lax.conv_general_dilated(y, w1, (1, 1), 'VALID',
                                     dimension_numbers=dn,
                                     precision=jax.lax.Precision.HIGHEST)
    z = jax.nn.relu(bn(z, g2, b2))
    return jax.lax.conv_general_dilated(z, w2, (1, 1), ((1, 1), (1, 1)),
                                        dimension_numbers=dn,
                                        precision=jax.lax.Precision.HIGHEST)


if __name__ == "__main__":
    key = jax.random.PRNGKey(0)
    k1, k2, k3 = jax.random.split(key, 3)
    x = jax.random.normal(k1, (1, C_IN, H, W), jnp.float32)
    # Conv2d(1152, 128, 1x1, bias=False) / Conv2d(128, 32, 3x3, bias=False)
    w1 = jax.random.normal(k2, (C_MID, C_IN, 1, 1), jnp.float32) * 0.02
    w2 = jax.random.normal(k3, (C_OUT, C_MID, 3, 3), jnp.float32) * 0.05
    # BatchNorm affine params at PyTorch defaults (weight=1, bias=0)
    g1 = jnp.ones((C_IN,), jnp.float32)
    b1 = jnp.zeros((C_IN,), jnp.float32)
    g2 = jnp.ones((C_MID,), jnp.float32)
    b2 = jnp.zeros((C_MID,), jnp.float32)

    out = run_module(x, w1, g1, b1, g2, b2, w2)
    jax.block_until_ready(out)

    ref = reference(x, w1, g1, b1, g2, b2, w2)
    assert out.shape == (1, C_OUT, H, W), out.shape
    assert jnp.allclose(out, ref, rtol=1e-2, atol=1e-2), \
        float(jnp.max(jnp.abs(out - ref)))
    print("KERNEL_OK")
</pallas_src>

<mosaic_0001>
module attributes {stable_mosaic.version = 11 : i64} {
  func.func @fused_kernel(%arg0: memref<49x1152xf32, #tpu.memory_space<vmem>>, %arg1: memref<1152x128xbf16, #tpu.memory_space<vmem>>, %arg2: memref<1x1152xf32, #tpu.memory_space<vmem>>, %arg3: memref<1x1152xf32, #tpu.memory_space<vmem>>, %arg4: memref<1x128xf32, #tpu.memory_space<vmem>>, %arg5: memref<1x128xf32, #tpu.memory_space<vmem>>, %arg6: memref<1152x32xbf16, #tpu.memory_space<vmem>>, %arg7: memref<64x32xf32, #tpu.memory_space<vmem>>, %arg8: memref<96x128xf32, #tpu.memory_space<vmem>>, %arg9: memref<64x1152xbf16, #tpu.memory_space<vmem>>) attributes {dimension_semantics = [], scalar_prefetch = 0 : i64, scratch_operands = 2 : i64, tpu.core_type = #tpu.core_type<tc>} {
    %c0 = arith.constant 0 : index
    %c0_0 = arith.constant 0 : index
    %0 = vector.load %arg0[%c0, %c0_0] : memref<49x1152xf32, #tpu.memory_space<vmem>>, vector<49x1152xf32>
    %cst = arith.constant dense<0.000000e+00> : vector<1152xf32>
    %1 = vector.multi_reduction <add>, %0, %cst [0] : vector<49x1152xf32> to vector<1152xf32>
    %2 = vector.shape_cast %1 : vector<1152xf32> to vector<1x1152xf32>
    %3 = arith.mulf %0, %0 : vector<49x1152xf32>
    %cst_1 = arith.constant dense<0.000000e+00> : vector<1152xf32>
    %4 = vector.multi_reduction <add>, %3, %cst_1 [0] : vector<49x1152xf32> to vector<1152xf32>
    %5 = vector.shape_cast %4 : vector<1152xf32> to vector<1x1152xf32>
    %cst_2 = arith.constant 0.0204081628 : f32
    %6 = vector.broadcast %cst_2 : f32 to vector<1x1152xf32>
    %7 = arith.mulf %2, %6 : vector<1x1152xf32>
    %cst_3 = arith.constant 0.0204081628 : f32
    %8 = vector.broadcast %cst_3 : f32 to vector<1x1152xf32>
    %9 = arith.mulf %5, %8 : vector<1x1152xf32>
    %10 = arith.mulf %7, %7 : vector<1x1152xf32>
    %11 = arith.subf %9, %10 : vector<1x1152xf32>
    %c0_4 = arith.constant 0 : index
    %c0_5 = arith.constant 0 : index
    %12 = vector.load %arg2[%c0_4, %c0_5] : memref<1x1152xf32, #tpu.memory_space<vmem>>, vector<1x1152xf32>
    %cst_6 = arith.constant 9.99999974E-6 : f32
    %13 = vector.broadcast %cst_6 : f32 to vector<1x1152xf32>
    %14 = arith.addf %11, %13 : vector<1x1152xf32>
    %15 = math.rsqrt %14 : vector<1x1152xf32>
    %16 = arith.mulf %12, %15 : vector<1x1152xf32>
    %c0_7 = arith.constant 0 : index
    %c0_8 = arith.constant 0 : index
    %17 = vector.load %arg3[%c0_7, %c0_8] : memref<1x1152xf32, #tpu.memory_space<vmem>>, vector<1x1152xf32>
    %18 = arith.mulf %7, %16 : vector<1x1152xf32>
    %19 = arith.subf %17, %18 : vector<1x1152xf32>
    %c0_9 = arith.constant 0 : index
    %c0_10 = arith.constant 0 : index
    %20 = vector.load %arg0[%c0_9, %c0_10] : memref<49x1152xf32, #tpu.memory_space<vmem>>, vector<49x1152xf32>
    %21 = vector.broadcast %16 : vector<1x1152xf32> to vector<49x1152xf32>
    %22 = arith.mulf %20, %21 : vector<49x1152xf32>
    %23 = vector.broadcast %19 : vector<1x1152xf32> to vector<49x1152xf32>
    %24 = arith.addf %22, %23 : vector<49x1152xf32>
    %cst_11 = arith.constant 0.000000e+00 : f32
    %25 = vector.broadcast %cst_11 : f32 to vector<49x1152xf32>
    %26 = arith.maximumf %24, %25 : vector<49x1152xf32>
    %27 = arith.truncf %26 : vector<49x1152xf32> to vector<49x1152xbf16>
    %c0_12 = arith.constant 0 : index
    %c0_13 = arith.constant 0 : index
    %28 = vector.load %arg1[%c0_12, %c0_13] : memref<1152x128xbf16, #tpu.memory_space<vmem>>, vector<1152x128xbf16>
    %cst_14 = arith.constant dense<0.000000e+00> : vector<49x128xf32>
    %29 = tpu.matmul %27, %28, %cst_14 {dimension_numbers = #tpu.dot_dimension_numbers<[1], [0], [0], [1], [0, 0, 1, 1], [], []>} : vector<49x1152xbf16>, vector<1152x128xbf16>, vector<49x128xf32> -> vector<49x128xf32>
    %cst_15 = arith.constant dense<0.000000e+00> : vector<128xf32>
    %30 = vector.multi_reduction <add>, %29, %cst_15 [0] : vector<49x128xf32> to vector<128xf32>
    %31 = vector.shape_cast %30 : vector<128xf32> to vector<1x128xf32>
    %32 = arith.mulf %29, %29 : vector<49x128xf32>
    %cst_16 = arith.constant dense<0.000000e+00> : vector<128xf32>
    %33 = vector.multi_reduction <add>, %32, %cst_16 [0] : vector<49x128xf32> to vector<128xf32>
    %34 = vector.shape_cast %33 : vector<128xf32> to vector<1x128xf32>
    %cst_17 = arith.constant 0.0204081628 : f32
    %35 = vector.broadcast %cst_17 : f32 to vector<1x128xf32>
    %36 = arith.mulf %31, %35 : vector<1x128xf32>
    %cst_18 = arith.constant 0.0204081628 : f32
    %37 = vector.broadcast %cst_18 : f32 to vector<1x128xf32>
    %38 = arith.mulf %34, %37 : vector<1x128xf32>
    %39 = arith.mulf %36, %36 : vector<1x128xf32>
    %40 = arith.subf %38, %39 : vector<1x128xf32>
    %c0_19 = arith.constant 0 : index
    %c0_20 = arith.constant 0 : index
    %41 = vector.load %arg4[%c0_19, %c0_20] : memref<1x128xf32, #tpu.memory_space<vmem>>, vector<1x128xf32>
    %cst_21 = arith.constant 9.99999974E-6 : f32
    %42 = vector.broadcast %cst_21 : f32 to vector<1x128xf32>
    %43 = arith.addf %40, %42 : vector<1x128xf32>
    %44 = math.rsqrt %43 : vector<1x128xf32>
    %45 = arith.mulf %41, %44 : vector<1x128xf32>
    %c0_22 = arith.constant 0 : index
    %c0_23 = arith.constant 0 : index
    %46 = vector.load %arg5[%c0_22, %c0_23] : memref<1x128xf32, #tpu.memory_space<vmem>>, vector<1x128xf32>
    %47 = arith.mulf %36, %45 : vector<1x128xf32>
    %48 = arith.subf %46, %47 : vector<1x128xf32>
    %49 = vector.broadcast %45 : vector<1x128xf32> to vector<49x128xf32>
    %50 = arith.mulf %29, %49 : vector<49x128xf32>
    %51 = vector.broadcast %48 : vector<1x128xf32> to vector<49x128xf32>
    %52 = arith.addf %50, %51 : vector<49x128xf32>
    %cst_24 = arith.constant 0.000000e+00 : f32
    %53 = vector.broadcast %cst_24 : f32 to vector<49x128xf32>
    %54 = arith.maximumf %52, %53 : vector<49x128xf32>
    %cst_25 = arith.constant 0.000000e+00 : f32
    %55 = vector.broadcast %cst_25 : f32 to vector<81x128xf32>
    %c8 = arith.constant 8 : index
    %c0_26 = arith.constant 0 : index
    %56 = vector.load %arg8[%c8, %c0_26] : memref<96x128xf32, #tpu.memory_space<vmem>>, vector<81x128xf32>
    tpu.vector_store %arg8[%c8, %c0_26], %55 {strides = array<i32>} : memref<96x128xf32, #tpu.memory_space<vmem>>, vector<81x128xf32>,
    %57 = vector.extract_strided_slice %54 {offsets = [0, 0], sizes = [7, 128], strides = [1, 1]} : vector<49x128xf32> to vector<7x128xf32>
    %c18 = arith.constant 18 : index
    %c0_27 = arith.constant 0 : index
    %58 = vector.load %arg8[%c18, %c0_27] : memref<96x128xf32, #tpu.memory_space<vmem>>, vector<7x128xf32>
    tpu.vector_store %arg8[%c18, %c0_27], %57 {strides = array<i32>} : memref<96x128xf32, #tpu.memory_space<vmem>>, vector<7x128xf32>,
    %59 = vector.extract_strided_slice %54 {offsets = [7, 0], sizes = [7, 128], strides = [1, 1]} : vector<49x128xf32> to vector<7x128xf32>
    %c27 = arith.constant 27 : index
    %c0_28 = arith.constant 0 : index
    %60 = vector.load %arg8[%c27, %c0_28] : memref<96x128xf32, #tpu.memory_space<vmem>>, vector<7x128xf32>
    tpu.vector_store %arg8[%c27, %c0_28], %59 {strides = array<i32>} : memref<96x128xf32, #tpu.memory_space<vmem>>, vector<7x128xf32>,
    %61 = vector.extract_strided_slice %54 {offsets = [14, 0], sizes = [7, 128], strides = [1, 1]} : vector<49x128xf32> to vector<7x128xf32>
    %c36 = arith.constant 36 : index
    %c0_29 = arith.constant 0 : index
    %62 = vector.load %arg8[%c36, %c0_29] : memref<96x128xf32, #tpu.memory_space<vmem>>, vector<7x128xf32>
    tpu.vector_store %arg8[%c36, %c0_29], %61 {strides = array<i32>} : memref<96x128xf32, #tpu.memory_space<vmem>>, vector<7x128xf32>,
    %63 = vector.extract_strided_slice %54 {offsets = [21, 0], sizes = [7, 128], strides = [1, 1]} : vector<49x128xf32> to vector<7x128xf32>
    %c45 = arith.constant 45 : index
    %c0_30 = arith.constant 0 : index
    %64 = vector.load %arg8[%c45, %c0_30] : memref<96x128xf32, #tpu.memory_space<vmem>>, vector<7x128xf32>
    tpu.vector_store %arg8[%c45, %c0_30], %63 {strides = array<i32>} : memref<96x128xf32, #tpu.memory_space<vmem>>, vector<7x128xf32>,
    %65 = vector.extract_strided_slice %54 {offsets = [28, 0], sizes = [7, 128], strides = [1, 1]} : vector<49x128xf32> to vector<7x128xf32>
    %c54 = arith.constant 54 : index
    %c0_31 = arith.constant 0 : index
    %66 = vector.load %arg8[%c54, %c0_31] : memref<96x128xf32, #tpu.memory_space<vmem>>, vector<7x128xf32>
    tpu.vector_store %arg8[%c54, %c0_31], %65 {strides = array<i32>} : memref<96x128xf32, #tpu.memory_space<vmem>>, vector<7x128xf32>,
    %67 = vector.extract_strided_slice %54 {offsets = [35, 0], sizes = [7, 128], strides = [1, 1]} : vector<49x128xf32> to vector<7x128xf32>
    %c63 = arith.constant 63 : index
    %c0_32 = arith.constant 0 : index
    %68 = vector.load %arg8[%c63, %c0_32] : memref<96x128xf32, #tpu.memory_space<vmem>>, vector<7x128xf32>
    tpu.vector_store %arg8[%c63, %c0_32], %67 {strides = array<i32>} : memref<96x128xf32, #tpu.memory_space<vmem>>, vector<7x128xf32>,
    %69 = vector.extract_strided_slice %54 {offsets = [42, 0], sizes = [7, 128], strides = [1, 1]} : vector<49x128xf32> to vector<7x128xf32>
    %c72 = arith.constant 72 : index
    %c0_33 = arith.constant 0 : index
    %70 = vector.load %arg8[%c72, %c0_33] : memref<96x128xf32, #tpu.memory_space<vmem>>, vector<7x128xf32>
    tpu.vector_store %arg8[%c72, %c0_33], %69 {strides = array<i32>} : memref<96x128xf32, #tpu.memory_space<vmem>>, vector<7x128xf32>,
    %c7 = arith.constant 7 : index
    %c0_34 = arith.constant 0 : index
    %71 = vector.load %arg8[%c7, %c0_34] : memref<96x128xf32, #tpu.memory_space<vmem>>, vector<64x128xf32>
    %72 = arith.truncf %71 : vector<64x128xf32> to vector<64x128xbf16>
    %c0_35 = arith.constant 0 : index
    %c0_36 = arith.constant 0 : index
    %73 = vector.load %arg9[%c0_35, %c0_36] : memref<64x1152xbf16, #tpu.memory_space<vmem>>, vector<64x128xbf16>
    tpu.vector_store %arg9[%c0_35, %c0_36], %72 {strides = array<i32>} : memref<64x1152xbf16, #tpu.memory_space<vmem>>, vector<64x128xbf16>,
    %c8_37 = arith.constant 8 : index
    %c0_38 = arith.constant 0 : index
    %74 = vector.load %arg8[%c8_37, %c0_38] : memref<96x128xf32, #tpu.memory_space<vmem>>, vector<64x128xf32>
    %75 = arith.truncf %74 : vector<64x128xf32> to vector<64x128xbf16>
    %c0_39 = arith.constant 0 : index
    %c128 = arith.constant 128 : index
    %76 = vector.load %arg9[%c0_39, %c128] : memref<64x1152xbf16, #tpu.memory_space<vmem>>, vector<64x128xbf16>
    tpu.vector_store %arg9[%c0_39, %c128], %75 {strides = array<i32>} : memref<64x1152xbf16, #tpu.memory_space<vmem>>, vector<64x128xbf16>,
    %c9 = arith.constant 9 : index
    %c0_40 = arith.constant 0 : index
    %77 = vector.load %arg8[%c9, %c0_40] : memref<96x128xf32, #tpu.memory_space<vmem>>, vector<64x128xf32>
    %78 = arith.truncf %77 : vector<64x128xf32> to vector<64x128xbf16>
    %c0_41 = arith.constant 0 : index
    %c256 = arith.constant 256 : index
    %79 = vector.load %arg9[%c0_41, %c256] : memref<64x1152xbf16, #tpu.memory_space<vmem>>, vector<64x128xbf16>
    tpu.vector_store %arg9[%c0_41, %c256], %78 {strides = array<i32>} : memref<64x1152xbf16, #tpu.memory_space<vmem>>, vector<64x128xbf16>,
    %c16 = arith.constant 16 : index
    %c0_42 = arith.constant 0 : index
    %80 = vector.load %arg8[%c16, %c0_42] : memref<96x128xf32, #tpu.memory_space<vmem>>, vector<64x128xf32>
    %81 = arith.truncf %80 : vector<64x128xf32> to vector<64x128xbf16>
    %c0_43 = arith.constant 0 : index
    %c384 = arith.constant 384 : index
    %82 = vector.load %arg9[%c0_43, %c384] : memref<64x1152xbf16, #tpu.memory_space<vmem>>, vector<64x128xbf16>
    tpu.vector_store %arg9[%c0_43, %c384], %81 {strides = array<i32>} : memref<64x1152xbf16, #tpu.memory_space<vmem>>, vector<64x128xbf16>,
    %c17 = arith.constant 17 : index
    %c0_44 = arith.constant 0 : index
    %83 = vector.load %arg8[%c17, %c0_44] : memref<96x128xf32, #tpu.memory_space<vmem>>, vector<64x128xf32>
    %84 = arith.truncf %83 : vector<64x128xf32> to vector<64x128xbf16>
    %c0_45 = arith.constant 0 : index
    %c512 = arith.constant 512 : index
    %85 = vector.load %arg9[%c0_45, %c512] : memref<64x1152xbf16, #tpu.memory_space<vmem>>, vector<64x128xbf16>
    tpu.vector_store %arg9[%c0_45, %c512], %84 {strides = array<i32>} : memref<64x1152xbf16, #tpu.memory_space<vmem>>, vector<64x128xbf16>,
    %c18_46 = arith.constant 18 : index
    %c0_47 = arith.constant 0 : index
    %86 = vector.load %arg8[%c18_46, %c0_47] : memref<96x128xf32, #tpu.memory_space<vmem>>, vector<64x128xf32>
    %87 = arith.truncf %86 : vector<64x128xf32> to vector<64x128xbf16>
    %c0_48 = arith.constant 0 : index
    %c640 = arith.constant 640 : index
    %88 = vector.load %arg9[%c0_48, %c640] : memref<64x1152xbf16, #tpu.memory_space<vmem>>, vector<64x128xbf16>
    tpu.vector_store %arg9[%c0_48, %c640], %87 {strides = array<i32>} : memref<64x1152xbf16, #tpu.memory_space<vmem>>, vector<64x128xbf16>,
    %c25 = arith.constant 25 : index
    %c0_49 = arith.constant 0 : index
    %89 = vector.load %arg8[%c25, %c0_49] : memref<96x128xf32, #tpu.memory_space<vmem>>, vector<64x128xf32>
    %90 = arith.truncf %89 : vector<64x128xf32> to vector<64x128xbf16>
    %c0_50 = arith.constant 0 : index
    %c768 = arith.constant 768 : index
    %91 = vector.load %arg9[%c0_50, %c768] : memref<64x1152xbf16, #tpu.memory_space<vmem>>, vector<64x128xbf16>
    tpu.vector_store %arg9[%c0_50, %c768], %90 {strides = array<i32>} : memref<64x1152xbf16, #tpu.memory_space<vmem>>, vector<64x128xbf16>,
    %c26 = arith.constant 26 : index
    %c0_51 = arith.constant 0 : index
    %92 = vector.load %arg8[%c26, %c0_51] : memref<96x128xf32, #tpu.memory_space<vmem>>, vector<64x128xf32>
    %93 = arith.truncf %92 : vector<64x128xf32> to vector<64x128xbf16>
    %c0_52 = arith.constant 0 : index
    %c896 = arith.constant 896 : index
    %94 = vector.load %arg9[%c0_52, %c896] : memref<64x1152xbf16, #tpu.memory_space<vmem>>, vector<64x128xbf16>
    tpu.vector_store %arg9[%c0_52, %c896], %93 {strides = array<i32>} : memref<64x1152xbf16, #tpu.memory_space<vmem>>, vector<64x128xbf16>,
    %c27_53 = arith.constant 27 : index
    %c0_54 = arith.constant 0 : index
    %95 = vector.load %arg8[%c27_53, %c0_54] : memref<96x128xf32, #tpu.memory_space<vmem>>, vector<64x128xf32>
    %96 = arith.truncf %95 : vector<64x128xf32> to vector<64x128xbf16>
    %c0_55 = arith.constant 0 : index
    %c1024 = arith.constant 1024 : index
    %97 = vector.load %arg9[%c0_55, %c1024] : memref<64x1152xbf16, #tpu.memory_space<vmem>>, vector<64x128xbf16>
    tpu.vector_store %arg9[%c0_55, %c1024], %96 {strides = array<i32>} : memref<64x1152xbf16, #tpu.memory_space<vmem>>, vector<64x128xbf16>,
    %c0_56 = arith.constant 0 : index
    %c0_57 = arith.constant 0 : index
    %98 = vector.load %arg9[%c0_56, %c0_57] : memref<64x1152xbf16, #tpu.memory_space<vmem>>, vector<64x1152xbf16>
    %c0_58 = arith.constant 0 : index
    %c0_59 = arith.constant 0 : index
    %99 = vector.load %arg6[%c0_58, %c0_59] : memref<1152x32xbf16, #tpu.memory_space<vmem>>, vector<1152x32xbf16>
    %cst_60 = arith.constant dense<0.000000e+00> : vector<64x32xf32>
    %100 = tpu.matmul %98, %99, %cst_60 {dimension_numbers = #tpu.dot_dimension_numbers<[1], [0], [0], [1], [0, 0, 1, 1], [], []>} : vector<64x1152xbf16>, vector<1152x32xbf16>, vector<64x32xf32> -> vector<64x32xf32>
    %c0_61 = arith.constant 0 : index
    %c0_62 = arith.constant 0 : index
    %101 = vector.load %arg7[%c0_61, %c0_62] : memref<64x32xf32, #tpu.memory_space<vmem>>, vector<64x32xf32>
    tpu.vector_store %arg7[%c0_61, %c0_62], %100 {strides = array<i32>} : memref<64x32xf32, #tpu.memory_space<vmem>>, vector<64x32xf32>,
    return
  }
}

</mosaic_0001>

<llo_original>
// kernel: run_module.1
$region0: #{run_module.1}
  #allocation0 [shape = 'u32[]', space=smem, size = 0x4, offset = 0x4, fixed_abs, tag = 'smem constant byte address 0x4 - core index']
  #allocation1 [shape = 'u32[72,128]{1,0:T(1,128)}', space=vmem, size = 0x9000, scoped, tag = 'internal scratch']
  #allocation2 [shape = 'f32[96,128]{1,0:T(8,128)}', space=vmem, size = 0xc000, scoped, tag = 'scratch operand']
  #allocation3 [shape = 'bf16[64,1152]{1,0:T(8,128)(2,1)}', space=vmem, size = 0x24000, scoped, tag = 'scratch operand']
  %s0 = inlined_call_operand.vmem [shape: f32[49,1152], index: 0, kind: input, shape index: {}]
  %s1 = inlined_call_operand.vmem [shape: bf16[1152,128], index: 1, kind: input, shape index: {}]
  %s2 = inlined_call_operand.vmem [shape: f32[1,1152], index: 2, kind: input, shape index: {}]
  %s3 = inlined_call_operand.vmem [shape: f32[1,1152], index: 3, kind: input, shape index: {}]
  %s4 = inlined_call_operand.vmem [shape: f32[1,128], index: 4, kind: input, shape index: {}]
  %s5 = inlined_call_operand.vmem [shape: f32[1,128], index: 5, kind: input, shape index: {}]
  %s6 = inlined_call_operand.vmem [shape: bf16[1152,32], index: 6, kind: input, shape index: {}]
  %s7 = inlined_call_operand.vmem [shape: f32[64,32], index: 7, kind: output, shape index: {}]
  %s8 = sld [smem:[#allocation0]]
  $region38: #{run_module.1} parent=0
    _
  %s10 = ssub.s32 1, %s8
  %s11 = scalar_select 0, %s10, %s8
  // Predicated region
  $region2: #{run_module.1} parent=0 // pred_check
    _
  $region3: #{run_module.1} parent=0 // pred_check_branch
    %13 = sbr.rel (0) target = $region5
  $region4: #{run_module.1} parent=0 // pred_region
    _
  $region5: #{run_module.1} parent=0 // pred_fallthru
    _
  // Predicated region
  $region6: #{run_module.1} parent=0 // pred_check
    _
  $region7: #{run_module.1} parent=0 // pred_check_branch
    %15 = sbr.rel (0) target = $region9
  $region8: #{run_module.1} parent=0 // pred_region
    _
  $region9: #{run_module.1} parent=0 // pred_fallthru
    _
  // Predicated region
  $region10: #{run_module.1} parent=0 // pred_check
    _
  $region11: #{run_module.1} parent=0 // pred_check_branch
    %17 = sbr.rel (0) target = $region13
  $region12: #{run_module.1} parent=0 // pred_region
    _
  $region13: #{run_module.1} parent=0 // pred_fallthru
    _
  // Predicated region
  $region14: #{run_module.1} parent=0 // pred_check
    _
  $region15: #{run_module.1} parent=0 // pred_check_branch
    %19 = sbr.rel (0) target = $region17
  $region16: #{run_module.1} parent=0 // pred_region
    _
  $region17: #{run_module.1} parent=0 // pred_fallthru
    _
  // Predicated region
  $region18: #{run_module.1} parent=0 // pred_check
    _
  $region19: #{run_module.1} parent=0 // pred_check_branch
    %21 = sbr.rel (0) target = $region21
  $region20: #{run_module.1} parent=0 // pred_region
    _
  $region21: #{run_module.1} parent=0 // pred_fallthru
    _
  // Predicated region
  $region22: #{run_module.1} parent=0 // pred_check
    _
  $region23: #{run_module.1} parent=0 // pred_check_branch
    %23 = sbr.rel (0) target = $region25
  $region24: #{run_module.1} parent=0 // pred_region
    _
  $region25: #{run_module.1} parent=0 // pred_fallthru
    _
  // Predicated region
  $region26: #{run_module.1} parent=0 // pred_check
    _
  $region27: #{run_module.1} parent=0 // pred_check_branch
    %25 = sbr.rel (0) target = $region29
  $region28: #{run_module.1} parent=0 // pred_region
    _
  $region29: #{run_module.1} parent=0 // pred_fallthru
    _
  %v26 = vld [vmem:[%s0] sm:$0xff]
  %v27 = vld [vmem:[%s0 + $0x8] sm:$0xff]
  %v28 = vld [vmem:[%s0 + $0x10] sm:$0xff]
  %v29 = vld [vmem:[%s0 + $0x18] sm:$0xff]
  %v30 = vld [vmem:[%s0 + $0x20] sm:$0xff]
  %v31 = vld [vmem:[%s0 + $0x28] sm:$0xff]
  %v32 = vld [vmem:[%s0 + $0x30] sm:$0xff]
  %v33 = vld [vmem:[%s0 + $0x38] sm:$0xff]
  %v34 = vld [vmem:[%s0 + $0x40] sm:$0xff]
  %v35 = vld [vmem:[%s0 + $0x48] sm:$0xff]
  %v36 = vld [vmem:[%s0 + $0x50] sm:$0xff]
  %v37 = vld [vmem:[%s0 + $0x58] sm:$0xff]
  %v38 = vld [vmem:[%s0 + $0x60] sm:$0xff]
  %v39 = vld [vmem:[%s0 + $0x68] sm:$0xff]
  %v40 = vld [vmem:[%s0 + $0x70] sm:$0xff]
  %v41 = vld [vmem:[%s0 + $0x78] sm:$0xff]
  %v42 = vld [vmem:[%s0 + $0x80] sm:$0xff]
  %v43 = vld [vmem:[%s0 + $0x88] sm:$0xff]
  %v44 = vld [vmem:[%s0 + $0x90] sm:$0xff]
  %v45 = vld [vmem:[%s0 + $0x98] sm:$0xff]
  %v46 = vld [vmem:[%s0 + $0xa0] sm:$0xff]
  %v47 = vld [vmem:[%s0 + $0xa8] sm:$0xff]
  %v48 = vld [vmem:[%s0 + $0xb0] sm:$0xff]
  %v49 = vld [vmem:[%s0 + $0xb8] sm:$0xff]
  %v50 = vld [vmem:[%s0 + $0xc0] sm:$0xff]
  %v51 = vld [vmem:[%s0 + $0xc8] sm:$0xff]
  %v52 = vld [vmem:[%s0 + $0xd0] sm:$0xff]
  %v53 = vld [vmem:[%s0 + $0xd8] sm:$0xff]
  %v54 = vld [vmem:[%s0 + $0xe0] sm:$0xff]
  %v55 = vld [vmem:[%s0 + $0xe8] sm:$0xff]
  %v56 = vld [vmem:[%s0 + $0xf0] sm:$0xff]
  %v57 = vld [vmem:[%s0 + $0xf8] sm:$0xff]
  %v58 = vld [vmem:[%s0 + $0x100] sm:$0xff]
  %v59 = vld [vmem:[%s0 + $0x108] sm:$0xff]
  %v60 = vld [vmem:[%s0 + $0x110] sm:$0xff]
  %v61 = vld [vmem:[%s0 + $0x118] sm:$0xff]
  %v62 = vld [vmem:[%s0 + $0x120] sm:$0xff]
  %v63 = vld [vmem:[%s0 + $0x128] sm:$0xff]
  %v64 = vld [vmem:[%s0 + $0x130] sm:$0xff]
  %v65 = vld [vmem:[%s0 + $0x138] sm:$0xff]
  %v66 = vld [vmem:[%s0 + $0x140] sm:$0xff]
  %v67 = vld [vmem:[%s0 + $0x148] sm:$0xff]
  %v68 = vld [vmem:[%s0 + $0x150] sm:$0xff]
  %v69 = vld [vmem:[%s0 + $0x158] sm:$0xff]
  %v70 = vld [vmem:[%s0 + $0x160] sm:$0xff]
  %v71 = vld [vmem:[%s0 + $0x168] sm:$0xff]
  %v72 = vld [vmem:[%s0 + $0x170] sm:$0xff]
  %v73 = vld [vmem:[%s0 + $0x178] sm:$0xff]
  %v74 = vld [vmem:[%s0 + $0x180] sm:$0xff]
  %v75 = vld [vmem:[%s0 + $0x188] sm:$0xff]
  %v76 = vld [vmem:[%s0 + $0x190] sm:$0xff]
  %v77 = vld [vmem:[%s0 + $0x198] sm:$0xff]
  %v78 = vld [vmem:[%s0 + $0x1a0] sm:$0xff]
  %v79 = vld [vmem:[%s0 + $0x1a8] sm:$0xff]
  %v80 = vld [vmem:[%s0 + $0x1b0] sm:$0x1]
  %v81 = vld [vmem:[%s0 + $0x1b8] sm:$0x1]
  %v82 = vld [vmem:[%s0 + $0x1c0] sm:$0x1]
  %v83 = vld [vmem:[%s0 + $0x1c8] sm:$0x1]
  %v84 = vld [vmem:[%s0 + $0x1d0] sm:$0x1]
  %v85 = vld [vmem:[%s0 + $0x1d8] sm:$0x1]
  %v86 = vld [vmem:[%s0 + $0x1e0] sm:$0x1]
  %v87 = vld [vmem:[%s0 + $0x1e8] sm:$0x1]
  %v88 = vld [vmem:[%s0 + $0x1f0] sm:$0x1]
  %v89 = vadd.f32 %v26, %v35
  %v90 = vadd.f32 %v89, %v44
  %v91 = vadd.f32 %v90, %v53
  %v92 = vadd.f32 %v91, %v62
  %v93 = vadd.f32 %v92, %v71
  %vm94 = vcmask 1040384
  %v95 = vsel %vm94, %v80, 0.0
  %v96 = vadd.f32 %v93, %v95
  %v97 = vrot.slane %v96, 4
  %v98 = vadd.f32 %v96, %v97
  %v99 = vrot.slane %v98, 2
  %v100 = vadd.f32 %v98, %v99
  %v101 = vrot.slane %v100, 1
  %v102 = vadd.f32 %v100, %v101
  %v103 = vadd.f32 %v27, %v36
  %v104 = vadd.f32 %v103, %v45
  %v105 = vadd.f32 %v104, %v54
  %v106 = vadd.f32 %v105, %v63
  %v107 = vadd.f32 %v106, %v72
  %v108 = vsel %vm94, %v81, 0.0
  %v109 = vadd.f32 %v107, %v108
  %v110 = vrot.slane %v109, 4
  %v111 = vadd.f32 %v109, %v110
  %v112 = vrot.slane %v111, 2
  %v113 = vadd.f32 %v111, %v112
  %v114 = vrot.slane %v113, 1
  %v115 = vadd.f32 %v113, %v114
  %v116 = vadd.f32 %v28, %v37
  %v117 = vadd.f32 %v116, %v46
  %v118 = vadd.f32 %v117, %v55
  %v119 = vadd.f32 %v118, %v64
  %v120 = vadd.f32 %v119, %v73
  %v121 = vsel %vm94, %v82, 0.0
  %v122 = vadd.f32 %v120, %v121
  %v123 = vrot.slane %v122, 4
  %v124 = vadd.f32 %v122, %v123
  %v125 = vrot.slane %v124, 2
  %v126 = vadd.f32 %v124, %v125
  %v127 = vrot.slane %v126, 1
  %v128 = vadd.f32 %v126, %v127
  %v129 = vadd.f32 %v29, %v38
  %v130 = vadd.f32 %v129, %v47
  %v131 = vadd.f32 %v130, %v56
  %v132 = vadd.f32 %v131, %v65
  %v133 = vadd.f32 %v132, %v74
  %v134 = vsel %vm94, %v83, 0.0
  %v135 = vadd.f32 %v133, %v134
  %v136 = vrot.slane %v135, 4
  %v137 = vadd.f32 %v135, %v136
  %v138 = vrot.slane %v137, 2
  %v139 = vadd.f32 %v137, %v138
  %v140 = vrot.slane %v139, 1
  %v141 = vadd.f32 %v139, %v140
  %v142 = vadd.f32 %v30, %v39
  %v143 = vadd.f32 %v142, %v48
  %v144 = vadd.f32 %v143, %v57
  %v145 = vadd.f32 %v144, %v66
  %v146 = vadd.f32 %v145, %v75
  %v147 = vsel %vm94, %v84, 0.0
  %v148 = vadd.f32 %v146, %v147
  %v149 = vrot.slane %v148, 4
  %v150 = vadd.f32 %v148, %v149
  %v151 = vrot.slane %v150, 2
  %v152 = vadd.f32 %v150, %v151
  %v153 = vrot.slane %v152, 1
  %v154 = vadd.f32 %v152, %v153
  %v155 = vadd.f32 %v31, %v40
  %v156 = vadd.f32 %v155, %v49
  %v157 = vadd.f32 %v156, %v58
  %v158 = vadd.f32 %v157, %v67
  %v159 = vadd.f32 %v158, %v76
  %v160 = vsel %vm94, %v85, 0.0
  %v161 = vadd.f32 %v159, %v160
  %v162 = vrot.slane %v161, 4
  %v163 = vadd.f32 %v161, %v162
  %v164 = vrot.slane %v163, 2
  %v165 = vadd.f32 %v163, %v164
  %v166 = vrot.slane %v165, 1
  %v167 = vadd.f32 %v165, %v166
  %v168 = vadd.f32 %v32, %v41
  %v169 = vadd.f32 %v168, %v50
  %v170 = vadd.f32 %v169, %v59
  %v171 = vadd.f32 %v170, %v68
  %v172 = vadd.f32 %v171, %v77
  %v173 = vsel %vm94, %v86, 0.0
  %v174 = vadd.f32 %v172, %v173
  %v175 = vrot.slane %v174, 4
  %v176 = vadd.f32 %v174, %v175
  %v177 = vrot.slane %v176, 2
  %v178 = vadd.f32 %v176, %v177
  %v179 = vrot.slane %v178, 1
  %v180 = vadd.f32 %v178, %v179
  %v181 = vadd.f32 %v33, %v42
  %v182 = vadd.f32 %v181, %v51
  %v183 = vadd.f32 %v182, %v60
  %v184 = vadd.f32 %v183, %v69
  %v185 = vadd.f32 %v184, %v78
  %v186 = vsel %vm94, %v87, 0.0
  %v187 = vadd.f32 %v185, %v186
  %v188 = vrot.slane %v187, 4
  %v189 = vadd.f32 %v187, %v188
  %v190 = vrot.slane %v189, 2
  %v191 = vadd.f32 %v189, %v190
  %v192 = vrot.slane %v191, 1
  %v193 = vadd.f32 %v191, %v192
  %v194 = vadd.f32 %v34, %v43
  %v195 = vadd.f32 %v194, %v52
  %v196 = vadd.f32 %v195, %v61
  %v197 = vadd.f32 %v196, %v70
  %v198 = vadd.f32 %v197, %v79
  %v199 = vsel %vm94, %v88, 0.0
  %v200 = vadd.f32 %v198, %v199
  %v201 = vrot.slane %v200, 4
  %v202 = vadd.f32 %v200, %v201
  %v203 = vrot.slane %v202, 2
  %v204 = vadd.f32 %v202, %v203
  %v205 = vrot.slane %v204, 1
  %v206 = vadd.f32 %v204, %v205
  %v207 = vmul.f32 %v26, %v26
  %v208 = vmul.f32 %v27, %v27
  %v209 = vmul.f32 %v28, %v28
  %v210 = vmul.f32 %v29, %v29
  %v211 = vmul.f32 %v30, %v30
  %v212 = vmul.f32 %v31, %v31
  %v213 = vmul.f32 %v32, %v32
  %v214 = vmul.f32 %v33, %v33
  %v215 = vmul.f32 %v34, %v34
  %v216 = vmul.f32 %v35, %v35
  %v217 = vmul.f32 %v36, %v36
  %v218 = vmul.f32 %v37, %v37
  %v219 = vmul.f32 %v38, %v38
  %v220 = vmul.f32 %v39, %v39
  %v221 = vmul.f32 %v40, %v40
  %v222 = vmul.f32 %v41, %v41
  %v223 = vmul.f32 %v42, %v42
  %v224 = vmul.f32 %v43, %v43
  %v225 = vmul.f32 %v44, %v44
  %v226 = vmul.f32 %v45, %v45
  %v227 = vmul.f32 %v46, %v46
  %v228 = vmul.f32 %v47, %v47
  %v229 = vmul.f32 %v48, %v48
  %v230 = vmul.f32 %v49, %v49
  %v231 = vmul.f32 %v50, %v50
  %v232 = vmul.f32 %v51, %v51
  %v233 = vmul.f32 %v52, %v52
  %v234 = vmul.f32 %v53, %v53
  %v235 = vmul.f32 %v54, %v54
  %v236 = vmul.f32 %v55, %v55
  %v237 = vmul.f32 %v56, %v56
  %v238 = vmul.f32 %v57, %v57
  %v239 = vmul.f32 %v58, %v58
  %v240 = vmul.f32 %v59, %v59
  %v241 = vmul.f32 %v60, %v60
  %v242 = vmul.f32 %v61, %v61
  %v243 = vmul.f32 %v62, %v62
  %v244 = vmul.f32 %v63, %v63
  %v245 = vmul.f32 %v64, %v64
  %v246 = vmul.f32 %v65, %v65
  %v247 = vmul.f32 %v66, %v66
  %v248 = vmul.f32 %v67, %v67
  %v249 = vmul.f32 %v68, %v68
  %v250 = vmul.f32 %v69, %v69
  %v251 = vmul.f32 %v70, %v70
  %v252 = vmul.f32 %v71, %v71
  %v253 = vmul.f32 %v72, %v72
  %v254 = vmul.f32 %v73, %v73
  %v255 = vmul.f32 %v74, %v74
  %v256 = vmul.f32 %v75, %v75
  %v257 = vmul.f32 %v76, %v76
  %v258 = vmul.f32 %v77, %v77
  %v259 = vmul.f32 %v78, %v78
  %v260 = vmul.f32 %v79, %v79
  %v261 = vmul.f32 %v80, %v80
  %v262 = vmul.f32 %v81, %v81
  %v263 = vmul.f32 %v82, %v82
  %v264 = vmul.f32 %v83, %v83
  %v265 = vmul.f32 %v84, %v84
  %v266 = vmul.f32 %v85, %v85
  %v267 = vmul.f32 %v86, %v86
  %v268 = vmul.f32 %v87, %v87
  %v269 = vmul.f32 %v88, %v88
  %v270 = vadd.f32 %v207, %v216
  %v271 = vadd.f32 %v270, %v225
  %v272 = vadd.f32 %v271, %v234
  %v273 = vadd.f32 %v272, %v243
  %v274 = vadd.f32 %v273, %v252
  %v275 = vsel %vm94, %v261, 0.0
  %v276 = vadd.f32 %v274, %v275
  %v277 = vrot.slane %v276, 4
  %v278 = vadd.f32 %v276, %v277
  %v279 = vrot.slane %v278, 2
  %v280 = vadd.f32 %v278, %v279
  %v281 = vrot.slane %v280, 1
  %v282 = vadd.f32 %v280, %v281
  %v283 = vadd.f32 %v208, %v217
  %v284 = vadd.f32 %v283, %v226
  %v285 = vadd.f32 %v284, %v235
  %v286 = vadd.f32 %v285, %v244
  %v287 = vadd.f32 %v286, %v253
  %v288 = vsel %vm94, %v262, 0.0
  %v289 = vadd.f32 %v287, %v288
  %v290 = vrot.slane %v289, 4
  %v291 = vadd.f32 %v289, %v290
  %v292 = vrot.slane %v291, 2
  %v293 = vadd.f32 %v291, %v292
  %v294 = vrot.slane %v293, 1
  %v295 = vadd.f32 %v293, %v294
  %v296 = vadd.f32 %v209, %v218
  %v297 = vadd.f32 %v296, %v227
  %v298 = vadd.f32 %v297, %v236
  %v299 = vadd.f32 %v298, %v245
  %v300 = vadd.f32 %v299, %v254
  %v301 = vsel %vm94, %v263, 0.0
  %v302 = vadd.f32 %v300, %v301
  %v303 = vrot.slane %v302, 4
  %v304 = vadd.f32 %v302, %v303
  %v305 = vrot.slane %v304, 2
  %v306 = vadd.f32 %v304, %v305
  %v307 = vrot.slane %v306, 1
  %v308 = vadd.f32 %v306, %v307
  %v309 = vadd.f32 %v210, %v219
  %v310 = vadd.f32 %v309, %v228
  %v311 = vadd.f32 %v310, %v237
  %v312 = vadd.f32 %v311, %v246
  %v313 = vadd.f32 %v312, %v255
  %v314 = vsel %vm94, %v264, 0.0
  %v315 = vadd.f32 %v313, %v314
  %v316 = vrot.slane %v315, 4
  %v317 = vadd.f32 %v315, %v316
  %v318 = vrot.slane %v317, 2
  %v319 = vadd.f32 %v317, %v318
  %v320 = vrot.slane %v319, 1
  %v321 = vadd.f32 %v319, %v320
  %v322 = vadd.f32 %v211, %v220
  %v323 = vadd.f32 %v322, %v229
  %v324 = vadd.f32 %v323, %v238
  %v325 = vadd.f32 %v324, %v247
  %v326 = vadd.f32 %v325, %v256
  %v327 = vsel %vm94, %v265, 0.0
  %v328 = vadd.f32 %v326, %v327
  %v329 = vrot.slane %v328, 4
  %v330 = vadd.f32 %v328, %v329
  %v331 = vrot.slane %v330, 2
  %v332 = vadd.f32 %v330, %v331
  %v333 = vrot.slane %v332, 1
  %v334 = vadd.f32 %v332, %v333
  %v335 = vadd.f32 %v212, %v221
  %v336 = vadd.f32 %v335, %v230
  %v337 = vadd.f32 %v336, %v239
  %v338 = vadd.f32 %v337, %v248
  %v339 = vadd.f32 %v338, %v257
  %v340 = vsel %vm94, %v266, 0.0
  %v341 = vadd.f32 %v339, %v340
  %v342 = vrot.slane %v341, 4
  %v343 = vadd.f32 %v341, %v342
  %v344 = vrot.slane %v343, 2
  %v345 = vadd.f32 %v343, %v344
  %v346 = vrot.slane %v345, 1
  %v347 = vadd.f32 %v345, %v346
  %v348 = vadd.f32 %v213, %v222
  %v349 = vadd.f32 %v348, %v231
  %v350 = vadd.f32 %v349, %v240
  %v351 = vadd.f32 %v350, %v249
  %v352 = vadd.f32 %v351, %v258
  %v353 = vsel %vm94, %v267, 0.0
  %v354 = vadd.f32 %v352, %v353
  %v355 = vrot.slane %v354, 4
  %v356 = vadd.f32 %v354, %v355
  %v357 = vrot.slane %v356, 2
  %v358 = vadd.f32 %v356, %v357
  %v359 = vrot.slane %v358, 1
  %v360 = vadd.f32 %v358, %v359
  %v361 = vadd.f32 %v214, %v223
  %v362 = vadd.f32 %v361, %v232
  %v363 = vadd.f32 %v362, %v241
  %v364 = vadd.f32 %v363, %v250
  %v365 = vadd.f32 %v364, %v259
  %v366 = vsel %vm94, %v268, 0.0
  %v367 = vadd.f32 %v365, %v366
  %v368 = vrot.slane %v367, 4
  %v369 = vadd.f32 %v367, %v368
  %v370 = vrot.slane %v369, 2
  %v371 = vadd.f32 %v369, %v370
  %v372 = vrot.slane %v371, 1
  %v373 = vadd.f32 %v371, %v372
  %v374 = vadd.f32 %v215, %v224
  %v375 = vadd.f32 %v374, %v233
  %v376 = vadd.f32 %v375, %v242
  %v377 = vadd.f32 %v376, %v251
  %v378 = vadd.f32 %v377, %v260
  %v379 = vsel %vm94, %v269, 0.0
  %v380 = vadd.f32 %v378, %v379
  %v381 = vrot.slane %v380, 4
  %v382 = vadd.f32 %v380, %v381
  %v383 = vrot.slane %v382, 2
  %v384 = vadd.f32 %v382, %v383
  %v385 = vrot.slane %v384, 1
  %v386 = vadd.f32 %v384, %v385
  %v387 = vmul.f32 %v102, 0.020408163
  %v388 = vmul.f32 %v115, 0.020408163
  %v389 = vmul.f32 %v128, 0.020408163
  %v390 = vmul.f32 %v141, 0.020408163
  %v391 = vmul.f32 %v154, 0.020408163
  %v392 = vmul.f32 %v167, 0.020408163
  %v393 = vmul.f32 %v180, 0.020408163
  %v394 = vmul.f32 %v193, 0.020408163
  %v395 = vmul.f32 %v206, 0.020408163
  %v396 = vmul.f32 %v282, 0.020408163
  %v397 = vmul.f32 %v295, 0.020408163
  %v398 = vmul.f32 %v308, 0.020408163
  %v399 = vmul.f32 %v321, 0.020408163
  %v400 = vmul.f32 %v334, 0.020408163
  %v401 = vmul.f32 %v347, 0.020408163
  %v402 = vmul.f32 %v360, 0.020408163
  %v403 = vmul.f32 %v373, 0.020408163
  %v404 = vmul.f32 %v386, 0.020408163
  %v405 = vmul.f32 %v387, %v387
  %v406 = vmul.f32 %v388, %v388
  %v407 = vmul.f32 %v389, %v389
  %v408 = vmul.f32 %v390, %v390
  %v409 = vmul.f32 %v391, %v391
  %v410 = vmul.f32 %v392, %v392
  %v411 = vmul.f32 %v393, %v393
  %v412 = vmul.f32 %v394, %v394
  %v413 = vmul.f32 %v395, %v395
  %v414 = vsub.f32 %v396, %v405
  %v415 = vsub.f32 %v397, %v406
  %v416 = vsub.f32 %v398, %v407
  %v417 = vsub.f32 %v399, %v408
  %v418 = vsub.f32 %v400, %v409
  %v419 = vsub.f32 %v401, %v410
  %v420 = vsub.f32 %v402, %v411
  %v421 = vsub.f32 %v403, %v412
  %v422 = vsub.f32 %v404, %v413
  %v423 = vld [vmem:[%s2] sm:$0xff]
  %v424 = vld [vmem:[%s2 + $0x8] sm:$0x1]
  %v425 = vadd.f32 %v414, 1e-05
  %v426 = vadd.f32 %v415, 1e-05
  %v427 = vadd.f32 %v416, 1e-05
  %v428 = vadd.f32 %v417, 1e-05
  %v429 = vadd.f32 %v418, 1e-05
  %v430 = vadd.f32 %v419, 1e-05
  %v431 = vadd.f32 %v420, 1e-05
  %v432 = vadd.f32 %v421, 1e-05
  %v433 = vadd.f32 %v422, 1e-05
  %v434 = vrsqrt.pop %v425
  %v435 = vmul.f32 %v434, %v425
  %v436 = vmul.f32 %v435, %v434
  %v437 = vmul.f32 0.5, %v436
  %v438 = vsub.f32 1.5, %v437
  %v439 = vmul.f32 %v434, %v438
  %vm440 = vweird.f32 %v425
  %vm441 = vweird.f32 %v434
  %vm442 = vmor %vm440, %vm441
  %v443 = vsel %vm442, %v434, %v439
  %v444 = vrsqrt.pop %v426
  %v445 = vmul.f32 %v444, %v426
  %v446 = vmul.f32 %v445, %v444
  %v447 = vmul.f32 0.5, %v446
  %v448 = vsub.f32 1.5, %v447
  %v449 = vmul.f32 %v444, %v448
  %vm450 = vweird.f32 %v426
  %vm451 = vweird.f32 %v444
  %vm452 = vmor %vm450, %vm451
  %v453 = vsel %vm452, %v444, %v449
  %v454 = vrsqrt.pop %v427
  %v455 = vmul.f32 %v454, %v427
  %v456 = vmul.f32 %v455, %v454
  %v457 = vmul.f32 0.5, %v456
  %v458 = vsub.f32 1.5, %v457
  %v459 = vmul.f32 %v454, %v458
  %vm460 = vweird.f32 %v427
  %vm461 = vweird.f32 %v454
  %vm462 = vmor %vm460, %vm461
  %v463 = vsel %vm462, %v454, %v459
  %v464 = vrsqrt.pop %v428
  %v465 = vmul.f32 %v464, %v428
  %v466 = vmul.f32 %v465, %v464
  %v467 = vmul.f32 0.5, %v466
  %v468 = vsub.f32 1.5, %v467
  %v469 = vmul.f32 %v464, %v468
  %vm470 = vweird.f32 %v428
  %vm471 = vweird.f32 %v464
  %vm472 = vmor %vm470, %vm471
  %v473 = vsel %vm472, %v464, %v469
  %v474 = vrsqrt.pop %v429
  %v475 = vmul.f32 %v474, %v429
  %v476 = vmul.f32 %v475, %v474
  %v477 = vmul.f32 0.5, %v476
  %v478 = vsub.f32 1.5, %v477
  %v479 = vmul.f32 %v474, %v478
  %vm480 = vweird.f32 %v429
  %vm481 = vweird.f32 %v474
  %vm482 = vmor %vm480, %vm481
  %v483 = vsel %vm482, %v474, %v479
  %v484 = vrsqrt.pop %v430
  %v485 = vmul.f32 %v484, %v430
  %v486 = vmul.f32 %v485, %v484
  %v487 = vmul.f32 0.5, %v486
  %v488 = vsub.f32 1.5, %v487
  %v489 = vmul.f32 %v484, %v488
  %vm490 = vweird.f32 %v430
  %vm491 = vweird.f32 %v484
  %vm492 = vmor %vm490, %vm491
  %v493 = vsel %vm492, %v484, %v489
  %v494 = vrsqrt.pop %v431
  %v495 = vmul.f32 %v494, %v431
  %v496 = vmul.f32 %v495, %v494
  %v497 = vmul.f32 0.5, %v496
  %v498 = vsub.f32 1.5, %v497
  %v499 = vmul.f32 %v494, %v498
  %vm500 = vweird.f32 %v431
  %vm501 = vweird.f32 %v494
  %vm502 = vmor %vm500, %vm501
  %v503 = vsel %vm502, %v494, %v499
  %v504 = vrsqrt.pop %v432
  %v505 = vmul.f32 %v504, %v432
  %v506 = vmul.f32 %v505, %v504
  %v507 = vmul.f32 0.5, %v506
  %v508 = vsub.f32 1.5, %v507
  %v509 = vmul.f32 %v504, %v508
  %vm510 = vweird.f32 %v432
  %vm511 = vweird.f32 %v504
  %vm512 = vmor %vm510, %vm511
  %v513 = vsel %vm512, %v504, %v509
  %v514 = vrsqrt.pop %v433
  %v515 = vmul.f32 %v514, %v433
  %v516 = vmul.f32 %v515, %v514
  %v517 = vmul.f32 0.5, %v516
  %v518 = vsub.f32 1.5, %v517
  %v519 = vmul.f32 %v514, %v518
  %vm520 = vweird.f32 %v433
  %vm521 = vweird.f32 %v514
  %vm522 = vmor %vm520, %vm521
  %v523 = vsel %vm522, %v514, %v519
  %v532 = vrot.slane %v453, 7
  %v533 = vrot.slane %v463, 6
  %v534 = vrot.slane %v473, 5
  %v535 = vrot.slane %v483, 4
  %v536 = vrot.slane %v493, 3
  %v537 = vrot.slane %v503, 2
  %v538 = vrot.slane %v513, 1
  %v539 = vsel %vm94, %v443, %v532
  %vm540 = vcmask 1042434
  %v541 = vsel %vm540, %v533, %v534
  %vm542 = vcmask 1041408
  %v543 = vsel %vm542, %v539, %v541
  %vm544 = vcmask 1044484
  %v545 = vsel %vm544, %v535, %v536
  %vm546 = vcmask 1046534
  %v547 = vsel %vm546, %v537, %v538
  %vm548 = vcmask 1045508
  %v549 = vsel %vm548, %v545, %v547
  %vm550 = vcmask 1043456
  %v551 = vsel %vm550, %v543, %v549
  %v553 = vmul.f32 %v423, %v551
  %v554 = vmul.f32 %v424, %v523
  %v555 = vld [vmem:[%s3] sm:$0xff]
  %v556 = vld [vmem:[%s3 + $0x8] sm:$0x1]
  %v559 = vperm.slane %v553, 0
  %v560 = vperm.slane %v553, 1
  %v561 = vperm.slane %v553, 2
  %v562 = vperm.slane %v553, 3
  %v563 = vperm.slane %v553, 4
  %v564 = vperm.slane %v553, 5
  %v565 = vperm.slane %v553, 6
  %v566 = vperm.slane %v553, 7
  %v567 = vperm.slane %v554, 0
  %v577 = vmul.f32 %v387, %v559
  %v578 = vmul.f32 %v388, %v560
  %v579 = vmul.f32 %v389, %v561
  %v580 = vmul.f32 %v390, %v562
  %v581 = vmul.f32 %v391, %v563
  %v582 = vmul.f32 %v392, %v564
  %v583 = vmul.f32 %v393, %v565
  %v584 = vmul.f32 %v394, %v566
  %v585 = vmul.f32 %v395, %v567
  %v594 = vrot.slane %v578, 7
  %v595 = vrot.slane %v579, 6
  %v596 = vrot.slane %v580, 5
  %v597 = vrot.slane %v581, 4
  %v598 = vrot.slane %v582, 3
  %v599 = vrot.slane %v583, 2
  %v600 = vrot.slane %v584, 1
  %v601 = vsel %vm94, %v577, %v594
  %v602 = vsel %vm540, %v595, %v596
  %v603 = vsel %vm542, %v601, %v602
  %v604 = vsel %vm544, %v597, %v598
  %v605 = vsel %vm546, %v599, %v600
  %v606 = vsel %vm548, %v604, %v605
  %v607 = vsel %vm550, %v603, %v606
  %v609 = vsub.f32 %v555, %v607
  %v610 = vsub.f32 %v556, %v585
  %v611 = vmul.f32 %v26, %v559
  %v612 = vmul.f32 %v27, %v560
  %v613 = vmul.f32 %v28, %v561
  %v614 = vmul.f32 %v29, %v562
  %v615 = vmul.f32 %v30, %v563
  %v616 = vmul.f32 %v31, %v564
  %v617 = vmul.f32 %v32, %v565
  %v618 = vmul.f32 %v33, %v566
  %v619 = vmul.f32 %v34, %v567
  %v620 = vmul.f32 %v35, %v559
  %v621 = vmul.f32 %v36, %v560
  %v622 = vmul.f32 %v37, %v561
  %v623 = vmul.f32 %v38, %v562
  %v624 = vmul.f32 %v39, %v563
  %v625 = vmul.f32 %v40, %v564
  %v626 = vmul.f32 %v41, %v565
  %v627 = vmul.f32 %v42, %v566
  %v628 = vmul.f32 %v43, %v567
  %v629 = vmul.f32 %v44, %v559
  %v630 = vmul.f32 %v45, %v560
  %v631 = vmul.f32 %v46, %v561
  %v632 = vmul.f32 %v47, %v562
  %v633 = vmul.f32 %v48, %v563
  %v634 = vmul.f32 %v49, %v564
  %v635 = vmul.f32 %v50, %v565
  %v636 = vmul.f32 %v51, %v566
  %v637 = vmul.f32 %v52, %v567
  %v638 = vmul.f32 %v53, %v559
  %v639 = vmul.f32 %v54, %v560
  %v640 = vmul.f32 %v55, %v561
  %v641 = vmul.f32 %v56, %v562
  %v642 = vmul.f32 %v57, %v563
  %v643 = vmul.f32 %v58, %v564
  %v644 = vmul.f32 %v59, %v565
  %v645 = vmul.f32 %v60, %v566
  %v646 = vmul.f32 %v61, %v567
  %v647 = vmul.f32 %v62, %v559
  %v648 = vmul.f32 %v63, %v560
  %v649 = vmul.f32 %v64, %v561
  %v650 = vmul.f32 %v65, %v562
  %v651 = vmul.f32 %v66, %v563
  %v652 = vmul.f32 %v67, %v564
  %v653 = vmul.f32 %v68, %v565
  %v654 = vmul.f32 %v69, %v566
  %v655 = vmul.f32 %v70, %v567
  %v656 = vmul.f32 %v71, %v559
  %v657 = vmul.f32 %v72, %v560
  %v658 = vmul.f32 %v73, %v561
  %v659 = vmul.f32 %v74, %v562
  %v660 = vmul.f32 %v75, %v563
  %v661 = vmul.f32 %v76, %v564
  %v662 = vmul.f32 %v77, %v565
  %v663 = vmul.f32 %v78, %v566
  %v664 = vmul.f32 %v79, %v567
  %v665 = vmul.f32 %v80, %v559
  %v666 = vmul.f32 %v81, %v560
  %v667 = vmul.f32 %v82, %v561
  %v668 = vmul.f32 %v83, %v562
  %v669 = vmul.f32 %v84, %v563
  %v670 = vmul.f32 %v85, %v564
  %v671 = vmul.f32 %v86, %v565
  %v672 = vmul.f32 %v87, %v566
  %v673 = vmul.f32 %v88, %v567
  %v676 = vperm.slane %v609, 0
  %v677 = vperm.slane %v609, 1
  %v678 = vperm.slane %v609, 2
  %v679 = vperm.slane %v609, 3
  %v680 = vperm.slane %v609, 4
  %v681 = vperm.slane %v609, 5
  %v682 = vperm.slane %v609, 6
  %v683 = vperm.slane %v609, 7
  %v684 = vperm.slane %v610, 0
  %v694 = vadd.f32 %v611, %v676
  %v695 = vadd.f32 %v612, %v677
  %v696 = vadd.f32 %v613, %v678
  %v697 = vadd.f32 %v614, %v679
  %v698 = vadd.f32 %v615, %v680
  %v699 = vadd.f32 %v616, %v681
  %v700 = vadd.f32 %v617, %v682
  %v701 = vadd.f32 %v618, %v683
  %v702 = vadd.f32 %v619, %v684
  %v703 = vadd.f32 %v620, %v676
  %v704 = vadd.f32 %v621, %v677
  %v705 = vadd.f32 %v622, %v678
  %v706 = vadd.f32 %v623, %v679
  %v707 = vadd.f32 %v624, %v680
  %v708 = vadd.f32 %v625, %v681
  %v709 = vadd.f32 %v626, %v682
  %v710 = vadd.f32 %v627, %v683
  %v711 = vadd.f32 %v628, %v684
  %v712 = vadd.f32 %v629, %v676
  %v713 = vadd.f32 %v630, %v677
  %v714 = vadd.f32 %v631, %v678
  %v715 = vadd.f32 %v632, %v679
  %v716 = vadd.f32 %v633, %v680
  %v717 = vadd.f32 %v634, %v681
  %v718 = vadd.f32 %v635, %v682
  %v719 = vadd.f32 %v636, %v683
  %v720 = vadd.f32 %v637, %v684
  %v721 = vadd.f32 %v638, %v676
  %v722 = vadd.f32 %v639, %v677
  %v723 = vadd.f32 %v640, %v678
  %v724 = vadd.f32 %v641, %v679
  %v725 = vadd.f32 %v642, %v680
  %v726 = vadd.f32 %v643, %v681
  %v727 = vadd.f32 %v644, %v682
  %v728 = vadd.f32 %v645, %v683
  %v729 = vadd.f32 %v646, %v684
  %v730 = vadd.f32 %v647, %v676
  %v731 = vadd.f32 %v648, %v677
  %v732 = vadd.f32 %v649, %v678
  %v733 = vadd.f32 %v650, %v679
  %v734 = vadd.f32 %v651, %v680
  %v735 = vadd.f32 %v652, %v681
  %v736 = vadd.f32 %v653, %v682
  %v737 = vadd.f32 %v654, %v683
  %v738 = vadd.f32 %v655, %v684
  %v739 = vadd.f32 %v656, %v676
  %v740 = vadd.f32 %v657, %v677
  %v741 = vadd.f32 %v658, %v678
  %v742 = vadd.f32 %v659, %v679
  %v743 = vadd.f32 %v660, %v680
  %v744 = vadd.f32 %v661, %v681
  %v745 = vadd.f32 %v662, %v682
  %v746 = vadd.f32 %v663, %v683
  %v747 = vadd.f32 %v664, %v684
  %v748 = vadd.f32 %v665, %v676
  %v749 = vadd.f32 %v666, %v677
  %v750 = vadd.f32 %v667, %v678
  %v751 = vadd.f32 %v668, %v679
  %v752 = vadd.f32 %v669, %v680
  %v753 = vadd.f32 %v670, %v681
  %v754 = vadd.f32 %v671, %v682
  %v755 = vadd.f32 %v672, %v683
  %v756 = vadd.f32 %v673, %v684
  %v757 = vmax.f32 %v694, 0.0
  %v758 = vmax.f32 %v695, 0.0
  %v759 = vmax.f32 %v696, 0.0
  %v760 = vmax.f32 %v697, 0.0
  %v761 = vmax.f32 %v698, 0.0
  %v762 = vmax.f32 %v699, 0.0
  %v763 = vmax.f32 %v700, 0.0
  %v764 = vmax.f32 %v701, 0.0
  %v765 = vmax.f32 %v702, 0.0
  %v766 = vmax.f32 %v703, 0.0
  %v767 = vmax.f32 %v704, 0.0
  %v768 = vmax.f32 %v705, 0.0
  %v769 = vmax.f32 %v706, 0.0
  %v770 = vmax.f32 %v707, 0.0
  %v771 = vmax.f32 %v708, 0.0
  %v772 = vmax.f32 %v709, 0.0
  %v773 = vmax.f32 %v710, 0.0
  %v774 = vmax.f32 %v711, 0.0
  %v775 = vmax.f32 %v712, 0.0
  %v776 = vmax.f32 %v713, 0.0
  %v777 = vmax.f32 %v714, 0.0
  %v778 = vmax.f32 %v715, 0.0
  %v779 = vmax.f32 %v716, 0.0
  %v780 = vmax.f32 %v717, 0.0
  %v781 = vmax.f32 %v718, 0.0
  %v782 = vmax.f32 %v719, 0.0
  %v783 = vmax.f32 %v720, 0.0
  %v784 = vmax.f32 %v721, 0.0
  %v785 = vmax.f32 %v722, 0.0
  %v786 = vmax.f32 %v723, 0.0
  %v787 = vmax.f32 %v724, 0.0
  %v788 = vmax.f32 %v725, 0.0
  %v789 = vmax.f32 %v726, 0.0
  %v790 = vmax.f32 %v727, 0.0
  %v791 = vmax.f32 %v728, 0.0
  %v792 = vmax.f32 %v729, 0.0
  %v793 = vmax.f32 %v730, 0.0
  %v794 = vmax.f32 %v731, 0.0
  %v795 = vmax.f32 %v732, 0.0
  %v796 = vmax.f32 %v733, 0.0
  %v797 = vmax.f32 %v734, 0.0
  %v798 = vmax.f32 %v735, 0.0
  %v799 = vmax.f32 %v736, 0.0
  %v800 = vmax.f32 %v737, 0.0
  %v801 = vmax.f32 %v738, 0.0
  %v802 = vmax.f32 %v739, 0.0
  %v803 = vmax.f32 %v740, 0.0
  %v804 = vmax.f32 %v741, 0.0
  %v805 = vmax.f32 %v742, 0.0
  %v806 = vmax.f32 %v743, 0.0
  %v807 = vmax.f32 %v744, 0.0
  %v808 = vmax.f32 %v745, 0.0
  %v809 = vmax.f32 %v746, 0.0
  %v810 = vmax.f32 %v747, 0.0
  %v811 = vmax.f32 %v748, 0.0
  %v812 = vmax.f32 %v749, 0.0
  %v813 = vmax.f32 %v750, 0.0
  %v814 = vmax.f32 %v751, 0.0
  %v815 = vmax.f32 %v752, 0.0
  %v816 = vmax.f32 %v753, 0.0
  %v817 = vmax.f32 %v754, 0.0
  %v818 = vmax.f32 %v755, 0.0
  %v819 = vmax.f32 %v756, 0.0
  %v820 = vpack.c.bf16 %v766, %v757
  %v821 = vpack.c.bf16 %v767, %v758
  %v822 = vpack.c.bf16 %v768, %v759
  %v823 = vpack.c.bf16 %v769, %v760
  %v824 = vpack.c.bf16 %v770, %v761
  %v825 = vpack.c.bf16 %v771, %v762
  %v826 = vpack.c.bf16 %v772, %v763
  %v827 = vpack.c.bf16 %v773, %v764
  %v828 = vpack.c.bf16 %v774, %v765
  %v829 = vpack.c.bf16 %v784, %v775
  %v830 = vpack.c.bf16 %v785, %v776
  %v831 = vpack.c.bf16 %v786, %v777
  %v832 = vpack.c.bf16 %v787, %v778
  %v833 = vpack.c.bf16 %v788, %v779
  %v834 = vpack.c.bf16 %v789, %v780
  %v835 = vpack.c.bf16 %v790, %v781
  %v836 = vpack.c.bf16 %v791, %v782
  %v837 = vpack.c.bf16 %v792, %v783
  %v838 = vpack.c.bf16 %v802, %v793
  %v839 = vpack.c.bf16 %v803, %v794
  %v840 = vpack.c.bf16 %v804, %v795
  %v841 = vpack.c.bf16 %v805, %v796
  %v842 = vpack.c.bf16 %v806, %v797
  %v843 = vpack.c.bf16 %v807, %v798
  %v844 = vpack.c.bf16 %v808, %v799
  %v845 = vpack.c.bf16 %v809, %v800
  %v846 = vpack.c.bf16 %v810, %v801
  %v847 = vpack.c.bf16 %v811, %v811
  %v848 = vpack.c.bf16 %v812, %v812
  %v849 = vpack.c.bf16 %v813, %v813
  %v850 = vpack.c.bf16 %v814, %v814
  %v851 = vpack.c.bf16 %v815, %v815
  %v852 = vpack.c.bf16 %v816, %v816
  %v853 = vpack.c.bf16 %v817, %v817
  %v854 = vpack.c.bf16 %v818, %v818
  %v855 = vpack.c.bf16 %v819, %v819
  %v856 = vld [vmem:[%s1] sm:$0xf]
  %v857 = vld [vmem:[%s1 + $0x4] sm:$0xf]
  %v858 = vld [vmem:[%s1 + $0x8] sm:$0xf]
  %v859 = vld [vmem:[%s1 + $0xc] sm:$0xf]
  %v860 = vld [vmem:[%s1 + $0x10] sm:$0xf]
  %v861 = vld [vmem:[%s1 + $0x14] sm:$0xf]
  %v862 = vld [vmem:[%s1 + $0x18] sm:$0xf]
  %v863 = vld [vmem:[%s1 + $0x1c] sm:$0xf]
  %v864 = vld [vmem:[%s1 + $0x20] sm:$0xf]
  %v865 = vld [vmem:[%s1 + $0x24] sm:$0xf]
  %v866 = vld [vmem:[%s1 + $0x28] sm:$0xf]
  %v867 = vld [vmem:[%s1 + $0x2c] sm:$0xf]
  %v868 = vld [vmem:[%s1 + $0x30] sm:$0xf]
  %v869 = vld [vmem:[%s1 + $0x34] sm:$0xf]
  %v870 = vld [vmem:[%s1 + $0x38] sm:$0xf]
  %v871 = vld [vmem:[%s1 + $0x3c] sm:$0xf]
  %v872 = vld [vmem:[%s1 + $0x40] sm:$0xf]
  %v873 = vld [vmem:[%s1 + $0x44] sm:$0xf]
  %v874 = vld [vmem:[%s1 + $0x48] sm:$0xf]
  %v875 = vld [vmem:[%s1 + $0x4c] sm:$0xf]
  %v876 = vld [vmem:[%s1 + $0x50] sm:$0xf]
  %v877 = vld [vmem:[%s1 + $0x54] sm:$0xf]
  %v878 = vld [vmem:[%s1 + $0x58] sm:$0xf]
  %v879 = vld [vmem:[%s1 + $0x5c] sm:$0xf]
  %v880 = vld [vmem:[%s1 + $0x60] sm:$0xf]
  %v881 = vld [vmem:[%s1 + $0x64] sm:$0xf]
  %v882 = vld [vmem:[%s1 + $0x68] sm:$0xf]
  %v883 = vld [vmem:[%s1 + $0x6c] sm:$0xf]
  %v884 = vld [vmem:[%s1 + $0x70] sm:$0xf]
  %v885 = vld [vmem:[%s1 + $0x74] sm:$0xf]
  %v886 = vld [vmem:[%s1 + $0x78] sm:$0xf]
  %v887 = vld [vmem:[%s1 + $0x7c] sm:$0xf]
  %v888 = vld [vmem:[%s1 + $0x80] sm:$0xf]
  %v889 = vld [vmem:[%s1 + $0x84] sm:$0xf]
  %v890 = vld [vmem:[%s1 + $0x88] sm:$0xf]
  %v891 = vld [vmem:[%s1 + $0x8c] sm:$0xf]
  %v892 = vld [vmem:[%s1 + $0x90] sm:$0xf]
  %v893 = vld [vmem:[%s1 + $0x94] sm:$0xf]
  %v894 = vld [vmem:[%s1 + $0x98] sm:$0xf]
  %v895 = vld [vmem:[%s1 + $0x9c] sm:$0xf]
  %v896 = vld [vmem:[%s1 + $0xa0] sm:$0xf]
  %v897 = vld [vmem:[%s1 + $0xa4] sm:$0xf]
  %v898 = vld [vmem:[%s1 + $0xa8] sm:$0xf]
  %v899 = vld [vmem:[%s1 + $0xac] sm:$0xf]
  %v900 = vld [vmem:[%s1 + $0xb0] sm:$0xf]
  %v901 = vld [vmem:[%s1 + $0xb4] sm:$0xf]
  %v902 = vld [vmem:[%s1 + $0xb8] sm:$0xf]
  %v903 = vld [vmem:[%s1 + $0xbc] sm:$0xf]
  %v904 = vld [vmem:[%s1 + $0xc0] sm:$0xf]
  %v905 = vld [vmem:[%s1 + $0xc4] sm:$0xf]
  %v906 = vld [vmem:[%s1 + $0xc8] sm:$0xf]
  %v907 = vld [vmem:[%s1 + $0xcc] sm:$0xf]
  %v908 = vld [vmem:[%s1 + $0xd0] sm:$0xf]
  %v909 = vld [vmem:[%s1 + $0xd4] sm:$0xf]
  %v910 = vld [vmem:[%s1 + $0xd8] sm:$0xf]
  %v911 = vld [vmem:[%s1 + $0xdc] sm:$0xf]
  %v912 = vld [vmem:[%s1 + $0xe0] sm:$0xf]
  %v913 = vld [vmem:[%s1 + $0xe4] sm:$0xf]
  %v914 = vld [vmem:[%s1 + $0xe8] sm:$0xf]
  %v915 = vld [vmem:[%s1 + $0xec] sm:$0xf]
  %v916 = vld [vmem:[%s1 + $0xf0] sm:$0xf]
  %v917 = vld [vmem:[%s1 + $0xf4] sm:$0xf]
  %v918 = vld [vmem:[%s1 + $0xf8] sm:$0xf]
  %v919 = vld [vmem:[%s1 + $0xfc] sm:$0xf]
  %v920 = vld [vmem:[%s1 + $0x100] sm:$0xf]
  %v921 = vld [vmem:[%s1 + $0x104] sm:$0xf]
  %v922 = vld [vmem:[%s1 + $0x108] sm:$0xf]
  %v923 = vld [vmem:[%s1 + $0x10c] sm:$0xf]
  %v924 = vld [vmem:[%s1 + $0x110] sm:$0xf]
  %v925 = vld [vmem:[%s1 + $0x114] sm:$0xf]
  %v926 = vld [vmem:[%s1 + $0x118] sm:$0xf]
  %v927 = vld [vmem:[%s1 + $0x11c] sm:$0xf]
  %v928 = vld [vmem:[%s1 + $0x120] sm:$0xf]
  %v929 = vld [vmem:[%s1 + $0x124] sm:$0xf]
  %v930 = vld [vmem:[%s1 + $0x128] sm:$0xf]
  %v931 = vld [vmem:[%s1 + $0x12c] sm:$0xf]
  %v932 = vld [vmem:[%s1 + $0x130] sm:$0xf]
  %v933 = vld [vmem:[%s1 + $0x134] sm:$0xf]
  %v934 = vld [vmem:[%s1 + $0x138] sm:$0xf]
  %v935 = vld [vmem:[%s1 + $0x13c] sm:$0xf]
  %v936 = vld [vmem:[%s1 + $0x140] sm:$0xf]
  %v937 = vld [vmem:[%s1 + $0x144] sm:$0xf]
  %v938 = vld [vmem:[%s1 + $0x148] sm:$0xf]
  %v939 = vld [vmem:[%s1 + $0x14c] sm:$0xf]
  %v940 = vld [vmem:[%s1 + $0x150] sm:$0xf]
  %v941 = vld [vmem:[%s1 + $0x154] sm:$0xf]
  %v942 = vld [vmem:[%s1 + $0x158] sm:$0xf]
  %v943 = vld [vmem:[%s1 + $0x15c] sm:$0xf]
  %v944 = vld [vmem:[%s1 + $0x160] sm:$0xf]
  %v945 = vld [vmem:[%s1 + $0x164] sm:$0xf]
  %v946 = vld [vmem:[%s1 + $0x168] sm:$0xf]
  %v947 = vld [vmem:[%s1 + $0x16c] sm:$0xf]
  %v948 = vld [vmem:[%s1 + $0x170] sm:$0xf]
  %v949 = vld [vmem:[%s1 + $0x174] sm:$0xf]
  %v950 = vld [vmem:[%s1 + $0x178] sm:$0xf]
  %v951 = vld [vmem:[%s1 + $0x17c] sm:$0xf]
  %v952 = vld [vmem:[%s1 + $0x180] sm:$0xf]
  %v953 = vld [vmem:[%s1 + $0x184] sm:$0xf]
  %v954 = vld [vmem:[%s1 + $0x188] sm:$0xf]
  %v955 = vld [vmem:[%s1 + $0x18c] sm:$0xf]
  %v956 = vld [vmem:[%s1 + $0x190] sm:$0xf]
  %v957 = vld [vmem:[%s1 + $0x194] sm:$0xf]
  %v958 = vld [vmem:[%s1 + $0x198] sm:$0xf]
  %v959 = vld [vmem:[%s1 + $0x19c] sm:$0xf]
  %v960 = vld [vmem:[%s1 + $0x1a0] sm:$0xf]
  %v961 = vld [vmem:[%s1 + $0x1a4] sm:$0xf]
  %v962 = vld [vmem:[%s1 + $0x1a8] sm:$0xf]
  %v963 = vld [vmem:[%s1 + $0x1ac] sm:$0xf]
  %v964 = vld [vmem:[%s1 + $0x1b0] sm:$0xf]
  %v965 = vld [vmem:[%s1 + $0x1b4] sm:$0xf]
  %v966 = vld [vmem:[%s1 + $0x1b8] sm:$0xf]
  %v967 = vld [vmem:[%s1 + $0x1bc] sm:$0xf]
  %v968 = vld [vmem:[%s1 + $0x1c0] sm:$0xf]
  %v969 = vld [vmem:[%s1 + $0x1c4] sm:$0xf]
  %v970 = vld [vmem:[%s1 + $0x1c8] sm:$0xf]
  %v971 = vld [vmem:[%s1 + $0x1cc] sm:$0xf]
  %v972 = vld [vmem:[%s1 + $0x1d0] sm:$0xf]
  %v973 = vld [vmem:[%s1 + $0x1d4] sm:$0xf]
  %v974 = vld [vmem:[%s1 + $0x1d8] sm:$0xf]
  %v975 = vld [vmem:[%s1 + $0x1dc] sm:$0xf]
  %v976 = vld [vmem:[%s1 + $0x1e0] sm:$0xf]
  %v977 = vld [vmem:[%s1 + $0x1e4] sm:$0xf]
  %v978 = vld [vmem:[%s1 + $0x1e8] sm:$0xf]
  %v979 = vld [vmem:[%s1 + $0x1ec] sm:$0xf]
  %v980 = vld [vmem:[%s1 + $0x1f0] sm:$0xf]
  %v981 = vld [vmem:[%s1 + $0x1f4] sm:$0xf]
  %v982 = vld [vmem:[%s1 + $0x1f8] sm:$0xf]
  %v983 = vld [vmem:[%s1 + $0x1fc] sm:$0xf]
  %v984 = vld [vmem:[%s1 + $0x200] sm:$0xf]
  %v985 = vld [vmem:[%s1 + $0x204] sm:$0xf]
  %v986 = vld [vmem:[%s1 + $0x208] sm:$0xf]
  %v987 = vld [vmem:[%s1 + $0x20c] sm:$0xf]
  %v988 = vld [vmem:[%s1 + $0x210] sm:$0xf]
  %v989 = vld [vmem:[%s1 + $0x214] sm:$0xf]
  %v990 = vld [vmem:[%s1 + $0x218] sm:$0xf]
  %v991 = vld [vmem:[%s1 + $0x21c] sm:$0xf]
  %v992 = vld [vmem:[%s1 + $0x220] sm:$0xf]
  %v993 = vld [vmem:[%s1 + $0x224] sm:$0xf]
  %v994 = vld [vmem:[%s1 + $0x228] sm:$0xf]
  %v995 = vld [vmem:[%s1 + $0x22c] sm:$0xf]
  %v996 = vld [vmem:[%s1 + $0x230] sm:$0xf]
  %v997 = vld [vmem:[%s1 + $0x234] sm:$0xf]
  %v998 = vld [vmem:[%s1 + $0x238] sm:$0xf]
  %v999 = vld [vmem:[%s1 + $0x23c] sm:$0xf]
  %v1144 = vunpack.c.l.b16 %v856
  %v1145 = vunpack.c.l.b16 %v857
  %v1146 = vunpack.c.l.b16 %v858
  %v1147 = vunpack.c.l.b16 %v859
  %v1148 = vunpack.c.l.b16 %v860
  %v1149 = vunpack.c.l.b16 %v861
  %v1150 = vunpack.c.l.b16 %v862
  %v1151 = vunpack.c.l.b16 %v863
  %v1152 = vunpack.c.l.b16 %v864
  %v1153 = vunpack.c.l.b16 %v865
  %v1154 = vunpack.c.l.b16 %v866
  %v1155 = vunpack.c.l.b16 %v867
  %v1156 = vunpack.c.l.b16 %v868
  %v1157 = vunpack.c.l.b16 %v869
  %v1158 = vunpack.c.l.b16 %v870
  %v1159 = vunpack.c.l.b16 %v871
  %v1160 = vunpack.c.l.b16 %v872
  %v1161 = vunpack.c.l.b16 %v873
  %v1162 = vunpack.c.l.b16 %v874
  %v1163 = vunpack.c.l.b16 %v875
  %v1164 = vunpack.c.l.b16 %v876
  %v1165 = vunpack.c.l.b16 %v877
  %v1166 = vunpack.c.l.b16 %v878
  %v1167 = vunpack.c.l.b16 %v879
  %v1168 = vunpack.c.l.b16 %v880
  %v1169 = vunpack.c.l.b16 %v881
  %v1170 = vunpack.c.l.b16 %v882
  %v1171 = vunpack.c.l.b16 %v883
  %v1172 = vunpack.c.l.b16 %v884
  %v1173 = vunpack.c.l.b16 %v885
  %v1174 = vunpack.c.l.b16 %v886
  %v1175 = vunpack.c.l.b16 %v887
  %v1176 = vunpack.c.l.b16 %v888
  %v1177 = vunpack.c.l.b16 %v889
  %v1178 = vunpack.c.l.b16 %v890
  %v1179 = vunpack.c.l.b16 %v891
  %v1180 = vunpack.c.l.b16 %v892
  %v1181 = vunpack.c.l.b16 %v893
  %v1182 = vunpack.c.l.b16 %v894
  %v1183 = vunpack.c.l.b16 %v895
  %v1184 = vunpack.c.l.b16 %v896
  %v1185 = vunpack.c.l.b16 %v897
  %v1186 = vunpack.c.l.b16 %v898
  %v1187 = vunpack.c.l.b16 %v899
  %v1188 = vunpack.c.l.b16 %v900
  %v1189 = vunpack.c.l.b16 %v901
  %v1190 = vunpack.c.l.b16 %v902
  %v1191 = vunpack.c.l.b16 %v903
  %v1192 = vunpack.c.l.b16 %v904
  %v1193 = vunpack.c.l.b16 %v905
  %v1194 = vunpack.c.l.b16 %v906
  %v1195 = vunpack.c.l.b16 %v907
  %v1196 = vunpack.c.l.b16 %v908
  %v1197 = vunpack.c.l.b16 %v909
  %v1198 = vunpack.c.l.b16 %v910
  %v1199 = vunpack.c.l.b16 %v911
  %v1200 = vunpack.c.l.b16 %v912
  %v1201 = vunpack.c.l.b16 %v913
  %v1202 = vunpack.c.l.b16 %v914
  %v1203 = vunpack.c.l.b16 %v915
  %v1204 = vunpack.c.l.b16 %v916
  %v1205 = vunpack.c.l.b16 %v917
  %v1206 = vunpack.c.l.b16 %v918
  %v1207 = vunpack.c.l.b16 %v919
  %v1208 = vunpack.c.l.b16 %v920
  %v1209 = vunpack.c.l.b16 %v921
  %v1210 = vunpack.c.l.b16 %v922
  %v1211 = vunpack.c.l.b16 %v923
  %v1212 = vunpack.c.l.b16 %v924
  %v1213 = vunpack.c.l.b16 %v925
  %v1214 = vunpack.c.l.b16 %v926
  %v1215 = vunpack.c.l.b16 %v927
  %v1216 = vunpack.c.l.b16 %v928
  %v1217 = vunpack.c.l.b16 %v929
  %v1218 = vunpack.c.l.b16 %v930
  %v1219 = vunpack.c.l.b16 %v931
  %v1220 = vunpack.c.l.b16 %v932
  %v1221 = vunpack.c.l.b16 %v933
  %v1222 = vunpack.c.l.b16 %v934
  %v1223 = vunpack.c.l.b16 %v935
  %v1224 = vunpack.c.l.b16 %v936
  %v1225 = vunpack.c.l.b16 %v937
  %v1226 = vunpack.c.l.b16 %v938
  %v1227 = vunpack.c.l.b16 %v939
  %v1228 = vunpack.c.l.b16 %v940
  %v1229 = vunpack.c.l.b16 %v941
  %v1230 = vunpack.c.l.b16 %v942
  %v1231 = vunpack.c.l.b16 %v943
  %v1232 = vunpack.c.l.b16 %v944
  %v1233 = vunpack.c.l.b16 %v945
  %v1234 = vunpack.c.l.b16 %v946
  %v1235 = vunpack.c.l.b16 %v947
  %v1236 = vunpack.c.l.b16 %v948
  %v1237 = vunpack.c.l.b16 %v949
  %v1238 = vunpack.c.l.b16 %v950
  %v1239 = vunpack.c.l.b16 %v951
  %v1240 = vunpack.c.l.b16 %v952
  %v1241 = vunpack.c.l.b16 %v953
  %v1242 = vunpack.c.l.b16 %v954
  %v1243 = vunpack.c.l.b16 %v955
  %v1244 = vunpack.c.l.b16 %v956
  %v1245 = vunpack.c.l.b16 %v957
  %v1246 = vunpack.c.l.b16 %v958
  %v1247 = vunpack.c.l.b16 %v959
  %v1248 = vunpack.c.l.b16 %v960
  %v1249 = vunpack.c.l.b16 %v961
  %v1250 = vunpack.c.l.b16 %v962
  %v1251 = vunpack.c.l.b16 %v963
  %v1252 = vunpack.c.l.b16 %v964
  %v1253 = vunpack.c.l.b16 %v965
  %v1254 = vunpack.c.l.b16 %v966
  %v1255 = vunpack.c.l.b16 %v967
  %v1256 = vunpack.c.l.b16 %v968
  %v1257 = vunpack.c.l.b16 %v969
  %v1258 = vunpack.c.l.b16 %v970
  %v1259 = vunpack.c.l.b16 %v971
  %v1260 = vunpack.c.l.b16 %v972
  %v1261 = vunpack.c.l.b16 %v973
  %v1262 = vunpack.c.l.b16 %v974
  %v1263 = vunpack.c.l.b16 %v975
  %v1264 = vunpack.c.l.b16 %v976
  %v1265 = vunpack.c.l.b16 %v977
  %v1266 = vunpack.c.l.b16 %v978
  %v1267 = vunpack.c.l.b16 %v979
  %v1268 = vunpack.c.l.b16 %v980
  %v1269 = vunpack.c.l.b16 %v981
  %v1270 = vunpack.c.l.b16 %v982
  %v1271 = vunpack.c.l.b16 %v983
  %v1272 = vunpack.c.l.b16 %v984
  %v1273 = vunpack.c.l.b16 %v985
  %v1274 = vunpack.c.l.b16 %v986
  %v1275 = vunpack.c.l.b16 %v987
  %v1276 = vunpack.c.l.b16 %v988
  %v1277 = vunpack.c.l.b16 %v989
  %v1278 = vunpack.c.l.b16 %v990
  %v1279 = vunpack.c.l.b16 %v991
  %v1280 = vunpack.c.l.b16 %v992
  %v1281 = vunpack.c.l.b16 %v993
  %v1282 = vunpack.c.l.b16 %v994
  %v1283 = vunpack.c.l.b16 %v995
  %v1284 = vunpack.c.l.b16 %v996
  %v1285 = vunpack.c.l.b16 %v997
  %v1286 = vunpack.c.l.b16 %v998
  %v1287 = vunpack.c.l.b16 %v999
  %v1288 = vpack.c.b16 %v1145, %v1144
  %v1289 = vpack.c.b16 %v1147, %v1146
  %v1290 = vpack.c.b16 %v1149, %v1148
  %v1291 = vpack.c.b16 %v1151, %v1150
  %v1292 = vpack.c.b16 %v1153, %v1152
  %v1293 = vpack.c.b16 %v1155, %v1154
  %v1294 = vpack.c.b16 %v1157, %v1156
  %v1295 = vpack.c.b16 %v1159, %v1158
  %v1296 = vpack.c.b16 %v1161, %v1160
  %v1297 = vpack.c.b16 %v1163, %v1162
  %v1298 = vpack.c.b16 %v1165, %v1164
  %v1299 = vpack.c.b16 %v1167, %v1166
  %v1300 = vpack.c.b16 %v1169, %v1168
  %v1301 = vpack.c.b16 %v1171, %v1170
  %v1302 = vpack.c.b16 %v1173, %v1172
  %v1303 = vpack.c.b16 %v1175, %v1174
  %v1304 = vpack.c.b16 %v1177, %v1176
  %v1305 = vpack.c.b16 %v1179, %v1178
  %v1306 = vpack.c.b16 %v1181, %v1180
  %v1307 = vpack.c.b16 %v1183, %v1182
  %v1308 = vpack.c.b16 %v1185, %v1184
  %v1309 = vpack.c.b16 %v1187, %v1186
  %v1310 = vpack.c.b16 %v1189, %v1188
  %v1311 = vpack.c.b16 %v1191, %v1190
  %v1312 = vpack.c.b16 %v1193, %v1192
  %v1313 = vpack.c.b16 %v1195, %v1194
  %v1314 = vpack.c.b16 %v1197, %v1196
  %v1315 = vpack.c.b16 %v1199, %v1198
  %v1316 = vpack.c.b16 %v1201, %v1200
  %v1317 = vpack.c.b16 %v1203, %v1202
  %v1318 = vpack.c.b16 %v1205, %v1204
  %v1319 = vpack.c.b16 %v1207, %v1206
  %v1320 = vpack.c.b16 %v1209, %v1208
  %v1321 = vpack.c.b16 %v1211, %v1210
  %v1322 = vpack.c.b16 %v1213, %v1212
  %v1323 = vpack.c.b16 %v1215, %v1214
  %v1324 = vpack.c.b16 %v1217, %v1216
  %v1325 = vpack.c.b16 %v1219, %v1218
  %v1326 = vpack.c.b16 %v1221, %v1220
  %v1327 = vpack.c.b16 %v1223, %v1222
  %v1328 = vpack.c.b16 %v1225, %v1224
  %v1329 = vpack.c.b16 %v1227, %v1226
  %v1330 = vpack.c.b16 %v1229, %v1228
  %v1331 = vpack.c.b16 %v1231, %v1230
  %v1332 = vpack.c.b16 %v1233, %v1232
  %v1333 = vpack.c.b16 %v1235, %v1234
  %v1334 = vpack.c.b16 %v1237, %v1236
  %v1335 = vpack.c.b16 %v1239, %v1238
  %v1336 = vpack.c.b16 %v1241, %v1240
  %v1337 = vpack.c.b16 %v1243, %v1242
  %v1338 = vpack.c.b16 %v1245, %v1244
  %v1339 = vpack.c.b16 %v1247, %v1246
  %v1340 = vpack.c.b16 %v1249, %v1248
  %v1341 = vpack.c.b16 %v1251, %v1250
  %v1342 = vpack.c.b16 %v1253, %v1252
  %v1343 = vpack.c.b16 %v1255, %v1254
  %v1344 = vpack.c.b16 %v1257, %v1256
  %v1345 = vpack.c.b16 %v1259, %v1258
  %v1346 = vpack.c.b16 %v1261, %v1260
  %v1347 = vpack.c.b16 %v1263, %v1262
  %v1348 = vpack.c.b16 %v1265, %v1264
  %v1349 = vpack.c.b16 %v1267, %v1266
  %v1350 = vpack.c.b16 %v1269, %v1268
  %v1351 = vpack.c.b16 %v1271, %v1270
  %v1352 = vpack.c.b16 %v1273, %v1272
  %v1353 = vpack.c.b16 %v1275, %v1274
  %v1354 = vpack.c.b16 %v1277, %v1276
  %v1355 = vpack.c.b16 %v1279, %v1278
  %v1356 = vpack.c.b16 %v1281, %v1280
  %v1357 = vpack.c.b16 %v1283, %v1282
  %v1358 = vpack.c.b16 %v1285, %v1284
  %v1359 = vpack.c.b16 %v1287, %v1286
  %1432 = vmatpush.bf16.msra.mxu0 %v1295
  %1433 = vmatpush.bf16.msra.mxu0 %v1294
  %1434 = vmatpush.bf16.msra.mxu0 %v1293
  %1435 = vmatpush.bf16.msra.mxu0 %v1292
  %1436 = vmatpush.bf16.msra.mxu0 %v1291
  %1437 = vmatpush.bf16.msra.mxu0 %v1290
  %1438 = vmatpush.bf16.msra.mxu0 %v1289
  %1439 = vmatpush.bf16.msra.mxu0 %v1288
  %1440 = vmatmul.bf16.gmra.mxu0 %v820
  %v1441 = vpop.f32.mrf.mxu0
  %v1442 = vadd.f32 0.0, %v1441
  %v1443 = vpop.f32.mrf.mxu0
  %v1444 = vadd.f32 0.0, %v1443
  %1445 = vmatmul.bf16.gmra.mxu0 %v829
  %v1446 = vpop.f32.mrf.mxu0
  %v1447 = vadd.f32 0.0, %v1446
  %v1448 = vpop.f32.mrf.mxu0
  %v1449 = vadd.f32 0.0, %v1448
  %1450 = vmatmul.bf16.gmra.mxu0 %v838
  %v1451 = vpop.f32.mrf.mxu0
  %v1452 = vadd.f32 0.0, %v1451
  %v1453 = vpop.f32.mrf.mxu0
  %v1454 = vadd.f32 0.0, %v1453
  %1455 = vmatmul.bf16.gmra.mxu0 %v847
  %v1456 = vpop.f32.mrf.mxu0
  %v1457 = vadd.f32 0.0, %v1456
  %v1458 = vpop.f32.mrf.mxu0
  %1459 = vdwg.mxu0
  %1460 = vmatpush.bf16.msra.mxu0 %v1303
  %1461 = vmatpush.bf16.msra.mxu0 %v1302
  %1462 = vmatpush.bf16.msra.mxu0 %v1301
  %1463 = vmatpush.bf16.msra.mxu0 %v1300
  %1464 = vmatpush.bf16.msra.mxu0 %v1299
  %1465 = vmatpush.bf16.msra.mxu0 %v1298
  %1466 = vmatpush.bf16.msra.mxu0 %v1297
  %1467 = vmatpush.bf16.msra.mxu0 %v1296
  %1468 = vmatmul.bf16.gmra.mxu0 %v821
  %v1469 = vpop.f32.mrf.mxu0
  %v1470 = vadd.f32 %v1442, %v1469
  %v1471 = vpop.f32.mrf.mxu0
  %v1472 = vadd.f32 %v1444, %v1471
  %1473 = vmatmul.bf16.gmra.mxu0 %v830
  %v1474 = vpop.f32.mrf.mxu0
  %v1475 = vadd.f32 %v1447, %v1474
  %v1476 = vpop.f32.mrf.mxu0
  %v1477 = vadd.f32 %v1449, %v1476
  %1478 = vmatmul.bf16.gmra.mxu0 %v839
  %v1479 = vpop.f32.mrf.mxu0
  %v1480 = vadd.f32 %v1452, %v1479
  %v1481 = vpop.f32.mrf.mxu0
  %v1482 = vadd.f32 %v1454, %v1481
  %1483 = vmatmul.bf16.gmra.mxu0 %v848
  %v1484 = vpop.f32.mrf.mxu0
  %v1485 = vadd.f32 %v1457, %v1484
  %v1486 = vpop.f32.mrf.mxu0
  %1487 = vdwg.mxu0
  %1488 = vmatpush.bf16.msra.mxu0 %v1311
  %1489 = vmatpush.bf16.msra.mxu0 %v1310
  %1490 = vmatpush.bf16.msra.mxu0 %v1309
  %1491 = vmatpush.bf16.msra.mxu0 %v1308
  %1492 = vmatpush.bf16.msra.mxu0 %v1307
  %1493 = vmatpush.bf16.msra.mxu0 %v1306
  %1494 = vmatpush.bf16.msra.mxu0 %v1305
  %1495 = vmatpush.bf16.msra.mxu0 %v1304
  %1496 = vmatmul.bf16.gmra.mxu0 %v822
  %v1497 = vpop.f32.mrf.mxu0
  %v1498 = vadd.f32 %v1470, %v1497
  %v1499 = vpop.f32.mrf.mxu0
  %v1500 = vadd.f32 %v1472, %v1499
  %1501 = vmatmul.bf16.gmra.mxu0 %v831
  %v1502 = vpop.f32.mrf.mxu0
  %v1503 = vadd.f32 %v1475, %v1502
  %v1504 = vpop.f32.mrf.mxu0
  %v1505 = vadd.f32 %v1477, %v1504
  %1506 = vmatmul.bf16.gmra.mxu0 %v840
  %v1507 = vpop.f32.mrf.mxu0
  %v1508 = vadd.f32 %v1480, %v1507
  %v1509 = vpop.f32.mrf.mxu0
  %v1510 = vadd.f32 %v1482, %v1509
  %1511 = vmatmul.bf16.gmra.mxu0 %v849
  %v1512 = vpop.f32.mrf.mxu0
  %v1513 = vadd.f32 %v1485, %v1512
  %v1514 = vpop.f32.mrf.mxu0
  %1515 = vdwg.mxu0
  %1516 = vmatpush.bf16.msra.mxu0 %v1319
  %1517 = vmatpush.bf16.msra.mxu0 %v1318
  %1518 = vmatpush.bf16.msra.mxu0 %v1317
  %1519 = vmatpush.bf16.msra.mxu0 %v1316
  %1520 = vmatpush.bf16.msra.mxu0 %v1315
  %1521 = vmatpush.bf16.msra.mxu0 %v1314
  %1522 = vmatpush.bf16.msra.mxu0 %v1313
  %1523 = vmatpush.bf16.msra.mxu0 %v1312
  %1524 = vmatmul.bf16.gmra.mxu0 %v823
  %v1525 = vpop.f32.mrf.mxu0
  %v1526 = vadd.f32 %v1498, %v1525
  %v1527 = vpop.f32.mrf.mxu0
  %v1528 = vadd.f32 %v1500, %v1527
  %1529 = vmatmul.bf16.gmra.mxu0 %v832
  %v1530 = vpop.f32.mrf.mxu0
  %v1531 = vadd.f32 %v1503, %v1530
  %v1532 = vpop.f32.mrf.mxu0
  %v1533 = vadd.f32 %v1505, %v1532
  %1534 = vmatmul.bf16.gmra.mxu0 %v841
  %v1535 = vpop.f32.mrf.mxu0
  %v1536 = vadd.f32 %v1508, %v1535
  %v1537 = vpop.f32.mrf.mxu0
  %v1538 = vadd.f32 %v1510, %v1537
  %1539 = vmatmul.bf16.gmra.mxu0 %v850
  %v1540 = vpop.f32.mrf.mxu0
  %v1541 = vadd.f32 %v1513, %v1540
  %v1542 = vpop.f32.mrf.mxu0
  %1543 = vdwg.mxu0
  %1544 = vmatpush.bf16.msra.mxu0 %v1327
  %1545 = vmatpush.bf16.msra.mxu0 %v1326
  %1546 = vmatpush.bf16.msra.mxu0 %v1325
  %1547 = vmatpush.bf16.msra.mxu0 %v1324
  %1548 = vmatpush.bf16.msra.mxu0 %v1323
  %1549 = vmatpush.bf16.msra.mxu0 %v1322
  %1550 = vmatpush.bf16.msra.mxu0 %v1321
  %1551 = vmatpush.bf16.msra.mxu0 %v1320
  %1552 = vmatmul.bf16.gmra.mxu0 %v824
  %v1553 = vpop.f32.mrf.mxu0
  %v1554 = vadd.f32 %v1526, %v1553
  %v1555 = vpop.f32.mrf.mxu0
  %v1556 = vadd.f32 %v1528, %v1555
  %1557 = vmatmul.bf16.gmra.mxu0 %v833
  %v1558 = vpop.f32.mrf.mxu0
  %v1559 = vadd.f32 %v1531, %v1558
  %v1560 = vpop.f32.mrf.mxu0
  %v1561 = vadd.f32 %v1533, %v1560
  %1562 = vmatmul.bf16.gmra.mxu0 %v842
  %v1563 = vpop.f32.mrf.mxu0
  %v1564 = vadd.f32 %v1536, %v1563
  %v1565 = vpop.f32.mrf.mxu0
  %v1566 = vadd.f32 %v1538, %v1565
  %1567 = vmatmul.bf16.gmra.mxu0 %v851
  %v1568 = vpop.f32.mrf.mxu0
  %v1569 = vadd.f32 %v1541, %v1568
  %v1570 = vpop.f32.mrf.mxu0
  %1571 = vdwg.mxu0
  %1572 = vmatpush.bf16.msra.mxu0 %v1335
  %1573 = vmatpush.bf16.msra.mxu0 %v1334
  %1574 = vmatpush.bf16.msra.mxu0 %v1333
  %1575 = vmatpush.bf16.msra.mxu0 %v1332
  %1576 = vmatpush.bf16.msra.mxu0 %v1331
  %1577 = vmatpush.bf16.msra.mxu0 %v1330
  %1578 = vmatpush.bf16.msra.mxu0 %v1329
  %1579 = vmatpush.bf16.msra.mxu0 %v1328
  %1580 = vmatmul.bf16.gmra.mxu0 %v825
  %v1581 = vpop.f32.mrf.mxu0
  %v1582 = vadd.f32 %v1554, %v1581
  %v1583 = vpop.f32.mrf.mxu0
  %v1584 = vadd.f32 %v1556, %v1583
  %1585 = vmatmul.bf16.gmra.mxu0 %v834
  %v1586 = vpop.f32.mrf.mxu0
  %v1587 = vadd.f32 %v1559, %v1586
  %v1588 = vpop.f32.mrf.mxu0
  %v1589 = vadd.f32 %v1561, %v1588
  %1590 = vmatmul.bf16.gmra.mxu0 %v843
  %v1591 = vpop.f32.mrf.mxu0
  %v1592 = vadd.f32 %v1564, %v1591
  %v1593 = vpop.f32.mrf.mxu0
  %v1594 = vadd.f32 %v1566, %v1593
  %1595 = vmatmul.bf16.gmra.mxu0 %v852
  %v1596 = vpop.f32.mrf.mxu0
  %v1597 = vadd.f32 %v1569, %v1596
  %v1598 = vpop.f32.mrf.mxu0
  %1599 = vdwg.mxu0
  %1600 = vmatpush.bf16.msra.mxu0 %v1343
  %1601 = vmatpush.bf16.msra.mxu0 %v1342
  %1602 = vmatpush.bf16.msra.mxu0 %v1341
  %1603 = vmatpush.bf16.msra.mxu0 %v1340
  %1604 = vmatpush.bf16.msra.mxu0 %v1339
  %1605 = vmatpush.bf16.msra.mxu0 %v1338
  %1606 = vmatpush.bf16.msra.mxu0 %v1337
  %1607 = vmatpush.bf16.msra.mxu0 %v1336
  %1608 = vmatmul.bf16.gmra.mxu0 %v826
  %v1609 = vpop.f32.mrf.mxu0
  %v1610 = vadd.f32 %v1582, %v1609
  %v1611 = vpop.f32.mrf.mxu0
  %v1612 = vadd.f32 %v1584, %v1611
  %1613 = vmatmul.bf16.gmra.mxu0 %v835
  %v1614 = vpop.f32.mrf.mxu0
  %v1615 = vadd.f32 %v1587, %v1614
  %v1616 = vpop.f32.mrf.mxu0
  %v1617 = vadd.f32 %v1589, %v1616
  %1618 = vmatmul.bf16.gmra.mxu0 %v844
  %v1619 = vpop.f32.mrf.mxu0
  %v1620 = vadd.f32 %v1592, %v1619
  %v1621 = vpop.f32.mrf.mxu0
  %v1622 = vadd.f32 %v1594, %v1621
  %1623 = vmatmul.bf16.gmra.mxu0 %v853
  %v1624 = vpop.f32.mrf.mxu0
  %v1625 = vadd.f32 %v1597, %v1624
  %v1626 = vpop.f32.mrf.mxu0
  %1627 = vdwg.mxu0
  %1628 = vmatpush.bf16.msra.mxu0 %v1351
  %1629 = vmatpush.bf16.msra.mxu0 %v1350
  %1630 = vmatpush.bf16.msra.mxu0 %v1349
  %1631 = vmatpush.bf16.msra.mxu0 %v1348
  %1632 = vmatpush.bf16.msra.mxu0 %v1347
  %1633 = vmatpush.bf16.msra.mxu0 %v1346
  %1634 = vmatpush.bf16.msra.mxu0 %v1345
  %1635 = vmatpush.bf16.msra.mxu0 %v1344
  %1636 = vmatmul.bf16.gmra.mxu0 %v827
  %v1637 = vpop.f32.mrf.mxu0
  %v1638 = vadd.f32 %v1610, %v1637
  %v1639 = vpop.f32.mrf.mxu0
  %v1640 = vadd.f32 %v1612, %v1639
  %1641 = vmatmul.bf16.gmra.mxu0 %v836
  %v1642 = vpop.f32.mrf.mxu0
  %v1643 = vadd.f32 %v1615, %v1642
  %v1644 = vpop.f32.mrf.mxu0
  %v1645 = vadd.f32 %v1617, %v1644
  %1646 = vmatmul.bf16.gmra.mxu0 %v845
  %v1647 = vpop.f32.mrf.mxu0
  %v1648 = vadd.f32 %v1620, %v1647
  %v1649 = vpop.f32.mrf.mxu0
  %v1650 = vadd.f32 %v1622, %v1649
  %1651 = vmatmul.bf16.gmra.mxu0 %v854
  %v1652 = vpop.f32.mrf.mxu0
  %v1653 = vadd.f32 %v1625, %v1652
  %v1654 = vpop.f32.mrf.mxu0
  %1655 = vdwg.mxu0
  %1656 = vmatpush.bf16.msra.mxu0 %v1359
  %1657 = vmatpush.bf16.msra.mxu0 %v1358
  %1658 = vmatpush.bf16.msra.mxu0 %v1357
  %1659 = vmatpush.bf16.msra.mxu0 %v1356
  %1660 = vmatpush.bf16.msra.mxu0 %v1355
  %1661 = vmatpush.bf16.msra.mxu0 %v1354
  %1662 = vmatpush.bf16.msra.mxu0 %v1353
  %1663 = vmatpush.bf16.msra.mxu0 %v1352
  %1664 = vmatmul.bf16.gmra.mxu0 %v828
  %v1665 = vpop.f32.mrf.mxu0
  %v1666 = vadd.f32 %v1638, %v1665
  %v1667 = vpop.f32.mrf.mxu0
  %v1668 = vadd.f32 %v1640, %v1667
  %1669 = vmatmul.bf16.gmra.mxu0 %v837
  %v1670 = vpop.f32.mrf.mxu0
  %v1671 = vadd.f32 %v1643, %v1670
  %v1672 = vpop.f32.mrf.mxu0
  %v1673 = vadd.f32 %v1645, %v1672
  %1674 = vmatmul.bf16.gmra.mxu0 %v846
  %v1675 = vpop.f32.mrf.mxu0
  %v1676 = vadd.f32 %v1648, %v1675
  %v1677 = vpop.f32.mrf.mxu0
  %v1678 = vadd.f32 %v1650, %v1677
  %1679 = vmatmul.bf16.gmra.mxu0 %v855
  %v1680 = vpop.f32.mrf.mxu0
  %v1681 = vadd.f32 %v1653, %v1680
  %v1682 = vpop.f32.mrf.mxu0
  %1683 = vdwg.mxu0
  %v1684 = vadd.f32 %v1666, %v1668
  %v1685 = vadd.f32 %v1684, %v1671
  %v1686 = vadd.f32 %v1685, %v1673
  %v1687 = vadd.f32 %v1686, %v1676
  %v1688 = vadd.f32 %v1687, %v1678
  %v1689 = vsel %vm94, %v1681, 0.0
  %v1690 = vadd.f32 %v1688, %v1689
  %v1691 = vrot.slane %v1690, 4
  %v1692 = vadd.f32 %v1690, %v1691
  %v1693 = vrot.slane %v1692, 2
  %v1694 = vadd.f32 %v1692, %v1693
  %v1695 = vrot.slane %v1694, 1
  %v1696 = vadd.f32 %v1694, %v1695
  %v1697 = vmul.f32 %v1666, %v1666
  %v1698 = vmul.f32 %v1668, %v1668
  %v1699 = vmul.f32 %v1671, %v1671
  %v1700 = vmul.f32 %v1673, %v1673
  %v1701 = vmul.f32 %v1676, %v1676
  %v1702 = vmul.f32 %v1678, %v1678
  %v1703 = vmul.f32 %v1681, %v1681
  %v1704 = vadd.f32 %v1697, %v1698
  %v1705 = vadd.f32 %v1704, %v1699
  %v1706 = vadd.f32 %v1705, %v1700
  %v1707 = vadd.f32 %v1706, %v1701
  %v1708 = vadd.f32 %v1707, %v1702
  %v1709 = vsel %vm94, %v1703, 0.0
  %v1710 = vadd.f32 %v1708, %v1709
  %v1711 = vrot.slane %v1710, 4
  %v1712 = vadd.f32 %v1710, %v1711
  %v1713 = vrot.slane %v1712, 2
  %v1714 = vadd.f32 %v1712, %v1713
  %v1715 = vrot.slane %v1714, 1
  %v1716 = vadd.f32 %v1714, %v1715
  %v1717 = vmul.f32 %v1696, 0.020408163
  %v1718 = vmul.f32 %v1716, 0.020408163
  %v1719 = vmul.f32 %v1717, %v1717
  %v1720 = vsub.f32 %v1718, %v1719
  %v1721 = vld [vmem:[%s4] sm:$0x1]
  %v1722 = vadd.f32 %v1720, 1e-05
  %v1723 = vrsqrt.pop %v1722
  %v1724 = vmul.f32 %v1723, %v1722
  %v1725 = vmul.f32 %v1724, %v1723
  %v1726 = vmul.f32 0.5, %v1725
  %v1727 = vsub.f32 1.5, %v1726
  %v1728 = vmul.f32 %v1723, %v1727
  %vm1729 = vweird.f32 %v1722
  %vm1730 = vweird.f32 %v1723
  %vm1731 = vmor %vm1729, %vm1730
  %v1732 = vsel %vm1731, %v1723, %v1728
  %v1733 = vmul.f32 %v1721, %v1732
  %v1734 = vld [vmem:[%s5] sm:$0x1]
  %v1735 = vmul.f32 %v1717, %v1733
  %v1736 = vsub.f32 %v1734, %v1735
  %v1738 = vperm.slane %v1733, 0
  %v1740 = vmul.f32 %v1666, %v1738
  %v1741 = vmul.f32 %v1668, %v1738
  %v1742 = vmul.f32 %v1671, %v1738
  %v1743 = vmul.f32 %v1673, %v1738
  %v1744 = vmul.f32 %v1676, %v1738
  %v1745 = vmul.f32 %v1678, %v1738
  %v1746 = vmul.f32 %v1681, %v1738
  %v1748 = vperm.slane %v1736, 0
  %v1750 = vadd.f32 %v1740, %v1748
  %v1751 = vadd.f32 %v1741, %v1748
  %v1752 = vadd.f32 %v1742, %v1748
  %v1753 = vadd.f32 %v1743, %v1748
  %v1754 = vadd.f32 %v1744, %v1748
  %v1755 = vadd.f32 %v1745, %v1748
  %v1756 = vadd.f32 %v1746, %v1748
  %v1757 = vmax.f32 %v1750, 0.0
  %v1758 = vmax.f32 %v1751, 0.0
  %v1759 = vmax.f32 %v1752, 0.0
  %v1760 = vmax.f32 %v1753, 0.0
  %v1761 = vmax.f32 %v1754, 0.0
  %v1762 = vmax.f32 %v1755, 0.0
  %v1763 = vmax.f32 %v1756, 0.0
  %1764 = vst [vmem:[#allocation2 + $0x8] sm:$0xff] 0.0
  %1765 = vst [vmem:[#allocation2 + $0x10] sm:$0xff] 0.0
  %1766 = vst [vmem:[#allocation2 + $0x18] sm:$0xff] 0.0
  %1767 = vst [vmem:[#allocation2 + $0x20] sm:$0xff] 0.0
  %1768 = vst [vmem:[#allocation2 + $0x28] sm:$0xff] 0.0
  %1769 = vst [vmem:[#allocation2 + $0x30] sm:$0xff] 0.0
  %1770 = vst [vmem:[#allocation2 + $0x38] sm:$0xff] 0.0
  %1771 = vst [vmem:[#allocation2 + $0x40] sm:$0xff] 0.0
  %1772 = vst [vmem:[#allocation2 + $0x48] sm:$0xff] 0.0
  %1773 = vst [vmem:[#allocation2 + $0x50] sm:$0xff] 0.0
  %1774 = vst [vmem:[#allocation2 + $0x58] sm:$0x1] 0.0
  %1775 = vst [vmem:[#allocation2 + $0x12] sm:$0x7f] %v1757
  %1776 = vst [vmem:[#allocation2 + $0x14] sm:$0x80] %v1757
  %1777 = vst [vmem:[#allocation2 + $0x1c] sm:$0x3f] %v1758
  %1778 = vst [vmem:[#allocation2 + $0x1e] sm:$0xc0] %v1758
  %1779 = vst [vmem:[#allocation2 + $0x26] sm:$0x1f] %v1759
  %1780 = vst [vmem:[#allocation2 + $0x28] sm:$0xe0] %v1759
  %1781 = vst [vmem:[#allocation2 + $0x30] sm:$0xf] %v1760
  %1782 = vst [vmem:[#allocation2 + $0x32] sm:$0xf0] %v1760
  %1783 = vst [vmem:[#allocation2 + $0x3a] sm:$0x7] %v1761
  %1784 = vst [vmem:[#allocation2 + $0x3c] sm:$0xf8] %v1761
  %1785 = vst [vmem:[#allocation2 + $0x44] sm:$0x3] %v1762
  %1786 = vst [vmem:[#allocation2 + $0x46] sm:$0xfc] %v1762
  %1787 = vst [vmem:[#allocation2 + $0x4e] sm:$0x1] %v1763
  %v1788 = vld [vmem:[#allocation2 + $0x7] sm:$0xff]
  %v1789 = vld [vmem:[#allocation2 + $0xf] sm:$0xff]
  %v1790 = vld [vmem:[#allocation2 + $0x17] sm:$0xff]
  %v1791 = vld [vmem:[#allocation2 + $0x1f] sm:$0xff]
  %v1792 = vld [vmem:[#allocation2 + $0x27] sm:$0xff]
  %v1793 = vld [vmem:[#allocation2 + $0x2f] sm:$0xff]
  %v1794 = vld [vmem:[#allocation2 + $0x37] sm:$0xff]
  %v1795 = vld [vmem:[#allocation2 + $0x3f] sm:$0xff]
  %v1796 = vpack.c.bf16 %v1788, %v1788
  %v1797 = vpack.c.bf16 %v1789, %v1789
  %v1798 = vpack.c.bf16 %v1790, %v1790
  %v1799 = vpack.c.bf16 %v1791, %v1791
  %v1800 = vpack.c.bf16 %v1792, %v1792
  %v1801 = vpack.c.bf16 %v1793, %v1793
  %v1802 = vpack.c.bf16 %v1794, %v1794
  %v1803 = vpack.c.bf16 %v1795, %v1795
  %1804 = vst [vmem:[#allocation3] sm:$0xf] %v1796
  %1805 = vst [vmem:[#allocation3 + $0x24] sm:$0xf] %v1797
  %1806 = vst [vmem:[#allocation3 + $0x48] sm:$0xf] %v1798
  %1807 = vst [vmem:[#allocation3 + $0x6c] sm:$0xf] %v1799
  %1808 = vst [vmem:[#allocation3 + $0x90] sm:$0xf] %v1800
  %1809 = vst [vmem:[#allocation3 + $0xb4] sm:$0xf] %v1801
  %1810 = vst [vmem:[#allocation3 + $0xd8] sm:$0xf] %v1802
  %1811 = vst [vmem:[#allocation3 + $0xfc] sm:$0xf] %v1803
  %v1812 = vld [vmem:[#allocation2 + $0x8] sm:$0xff]
  %v1813 = vld [vmem:[#allocation2 + $0x10] sm:$0xff]
  %v1814 = vld [vmem:[#allocation2 + $0x18] sm:$0xff]
  %v1815 = vld [vmem:[#allocation2 + $0x20] sm:$0xff]
  %v1816 = vld [vmem:[#allocation2 + $0x28] sm:$0xff]
  %v1817 = vld [vmem:[#allocation2 + $0x30] sm:$0xff]
  %v1818 = vld [vmem:[#allocation2 + $0x38] sm:$0xff]
  %v1819 = vld [vmem:[#allocation2 + $0x40] sm:$0xff]
  %v1820 = vpack.c.bf16 %v1812, %v1812
  %v1821 = vpack.c.bf16 %v1813, %v1813
  %v1822 = vpack.c.bf16 %v1814, %v1814
  %v1823 = vpack.c.bf16 %v1815, %v1815
  %v1824 = vpack.c.bf16 %v1816, %v1816
  %v1825 = vpack.c.bf16 %v1817, %v1817
  %v1826 = vpack.c.bf16 %v1818, %v1818
  %v1827 = vpack.c.bf16 %v1819, %v1819
  %1828 = vst [vmem:[#allocation3 + $0x4] sm:$0xf] %v1820
  %1829 = vst [vmem:[#allocation3 + $0x28] sm:$0xf] %v1821
  %1830 = vst [vmem:[#allocation3 + $0x4c] sm:$0xf] %v1822
  %1831 = vst [vmem:[#allocation3 + $0x70] sm:$0xf] %v1823
  %1832 = vst [vmem:[#allocation3 + $0x94] sm:$0xf] %v1824
  %1833 = vst [vmem:[#allocation3 + $0xb8] sm:$0xf] %v1825
  %1834 = vst [vmem:[#allocation3 + $0xdc] sm:$0xf] %v1826
  %1835 = vst [vmem:[#allocation3 + $0x100] sm:$0xf] %v1827
  %v1836 = vld [vmem:[#allocation2 + $0x9] sm:$0xff]
  %v1837 = vld [vmem:[#allocation2 + $0x11] sm:$0xff]
  %v1838 = vld [vmem:[#allocation2 + $0x19] sm:$0xff]
  %v1839 = vld [vmem:[#allocation2 + $0x21] sm:$0xff]
  %v1840 = vld [vmem:[#allocation2 + $0x29] sm:$0xff]
  %v1841 = vld [vmem:[#allocation2 + $0x31] sm:$0xff]
  %v1842 = vld [vmem:[#allocation2 + $0x39] sm:$0xff]
  %v1843 = vld [vmem:[#allocation2 + $0x41] sm:$0xff]
  %v1844 = vpack.c.bf16 %v1836, %v1836
  %v1845 = vpack.c.bf16 %v1837, %v1837
  %v1846 = vpack.c.bf16 %v1838, %v1838
  %v1847 = vpack.c.bf16 %v1839, %v1839
  %v1848 = vpack.c.bf16 %v1840, %v1840
  %v1849 = vpack.c.bf16 %v1841, %v1841
  %v1850 = vpack.c.bf16 %v1842, %v1842
  %v1851 = vpack.c.bf16 %v1843, %v1843
  %1852 = vst [vmem:[#allocation3 + $0x8] sm:$0xf] %v1844
  %1853 = vst [vmem:[#allocation3 + $0x2c] sm:$0xf] %v1845
  %1854 = vst [vmem:[#allocation3 + $0x50] sm:$0xf] %v1846
  %1855 = vst [vmem:[#allocation3 + $0x74] sm:$0xf] %v1847
  %1856 = vst [vmem:[#allocation3 + $0x98] sm:$0xf] %v1848
  %1857 = vst [vmem:[#allocation3 + $0xbc] sm:$0xf] %v1849
  %1858 = vst [vmem:[#allocation3 + $0xe0] sm:$0xf] %v1850
  %1859 = vst [vmem:[#allocation3 + $0x104] sm:$0xf] %v1851
  %v1860 = vld [vmem:[#allocation2 + $0x10] sm:$0xff]
  %v1861 = vld [vmem:[#allocation2 + $0x18] sm:$0xff]
  %v1862 = vld [vmem:[#allocation2 + $0x20] sm:$0xff]
  %v1863 = vld [vmem:[#allocation2 + $0x28] sm:$0xff]
  %v1864 = vld [vmem:[#allocation2 + $0x30] sm:$0xff]
  %v1865 = vld [vmem:[#allocation2 + $0x38] sm:$0xff]
  %v1866 = vld [vmem:[#allocation2 + $0x40] sm:$0xff]
  %v1867 = vld [vmem:[#allocation2 + $0x48] sm:$0xff]
  %v1868 = vpack.c.bf16 %v1860, %v1860
  %v1869 = vpack.c.bf16 %v1861, %v1861
  %v1870 = vpack.c.bf16 %v1862, %v1862
  %v1871 = vpack.c.bf16 %v1863, %v1863
  %v1872 = vpack.c.bf16 %v1864, %v1864
  %v1873 = vpack.c.bf16 %v1865, %v1865
  %v1874 = vpack.c.bf16 %v1866, %v1866
  %v1875 = vpack.c.bf16 %v1867, %v1867
  %1876 = vst [vmem:[#allocation3 + $0xc] sm:$0xf] %v1868
  %1877 = vst [vmem:[#allocation3 + $0x30] sm:$0xf] %v1869
  %1878 = vst [vmem:[#allocation3 + $0x54] sm:$0xf] %v1870
  %1879 = vst [vmem:[#allocation3 + $0x78] sm:$0xf] %v1871
  %1880 = vst [vmem:[#allocation3 + $0x9c] sm:$0xf] %v1872
  %1881 = vst [vmem:[#allocation3 + $0xc0] sm:$0xf] %v1873
  %1882 = vst [vmem:[#allocation3 + $0xe4] sm:$0xf] %v1874
  %1883 = vst [vmem:[#allocation3 + $0x108] sm:$0xf] %v1875
  %v1884 = vld [vmem:[#allocation2 + $0x11] sm:$0xff]
  %v1885 = vld [vmem:[#allocation2 + $0x19] sm:$0xff]
  %v1886 = vld [vmem:[#allocation2 + $0x21] sm:$0xff]
  %v1887 = vld [vmem:[#allocation2 + $0x29] sm:$0xff]
  %v1888 = vld [vmem:[#allocation2 + $0x31] sm:$0xff]
  %v1889 = vld [vmem:[#allocation2 + $0x39] sm:$0xff]
  %v1890 = vld [vmem:[#allocation2 + $0x41] sm:$0xff]
  %v1891 = vld [vmem:[#allocation2 + $0x49] sm:$0xff]
  %v1892 = vpack.c.bf16 %v1884, %v1884
  %v1893 = vpack.c.bf16 %v1885, %v1885
  %v1894 = vpack.c.bf16 %v1886, %v1886
  %v1895 = vpack.c.bf16 %v1887, %v1887
  %v1896 = vpack.c.bf16 %v1888, %v1888
  %v1897 = vpack.c.bf16 %v1889, %v1889
  %v1898 = vpack.c.bf16 %v1890, %v1890
  %v1899 = vpack.c.bf16 %v1891, %v1891
  %1900 = vst [vmem:[#allocation3 + $0x10] sm:$0xf] %v1892
  %1901 = vst [vmem:[#allocation3 + $0x34] sm:$0xf] %v1893
  %1902 = vst [vmem:[#allocation3 + $0x58] sm:$0xf] %v1894
  %1903 = vst [vmem:[#allocation3 + $0x7c] sm:$0xf] %v1895
  %1904 = vst [vmem:[#allocation3 + $0xa0] sm:$0xf] %v1896
  %1905 = vst [vmem:[#allocation3 + $0xc4] sm:$0xf] %v1897
  %1906 = vst [vmem:[#allocation3 + $0xe8] sm:$0xf] %v1898
  %1907 = vst [vmem:[#allocation3 + $0x10c] sm:$0xf] %v1899
  %v1908 = vld [vmem:[#allocation2 + $0x12] sm:$0xff]
  %v1909 = vld [vmem:[#allocation2 + $0x1a] sm:$0xff]
  %v1910 = vld [vmem:[#allocation2 + $0x22] sm:$0xff]
  %v1911 = vld [vmem:[#allocation2 + $0x2a] sm:$0xff]
  %v1912 = vld [vmem:[#allocation2 + $0x32] sm:$0xff]
  %v1913 = vld [vmem:[#allocation2 + $0x3a] sm:$0xff]
  %v1914 = vld [vmem:[#allocation2 + $0x42] sm:$0xff]
  %v1915 = vld [vmem:[#allocation2 + $0x4a] sm:$0xff]
  %v1916 = vpack.c.bf16 %v1908, %v1908
  %v1917 = vpack.c.bf16 %v1909, %v1909
  %v1918 = vpack.c.bf16 %v1910, %v1910
  %v1919 = vpack.c.bf16 %v1911, %v1911
  %v1920 = vpack.c.bf16 %v1912, %v1912
  %v1921 = vpack.c.bf16 %v1913, %v1913
  %v1922 = vpack.c.bf16 %v1914, %v1914
  %v1923 = vpack.c.bf16 %v1915, %v1915
  %1924 = vst [vmem:[#allocation3 + $0x14] sm:$0xf] %v1916
  %1925 = vst [vmem:[#allocation3 + $0x38] sm:$0xf] %v1917
  %1926 = vst [vmem:[#allocation3 + $0x5c] sm:$0xf] %v1918
  %1927 = vst [vmem:[#allocation3 + $0x80] sm:$0xf] %v1919
  %1928 = vst [vmem:[#allocation3 + $0xa4] sm:$0xf] %v1920
  %1929 = vst [vmem:[#allocation3 + $0xc8] sm:$0xf] %v1921
  %1930 = vst [vmem:[#allocation3 + $0xec] sm:$0xf] %v1922
  %1931 = vst [vmem:[#allocation3 + $0x110] sm:$0xf] %v1923
  %v1932 = vld [vmem:[#allocation2 + $0x19] sm:$0xff]
  %v1933 = vld [vmem:[#allocation2 + $0x21] sm:$0xff]
  %v1934 = vld [vmem:[#allocation2 + $0x29] sm:$0xff]
  %v1935 = vld [vmem:[#allocation2 + $0x31] sm:$0xff]
  %v1936 = vld [vmem:[#allocation2 + $0x39] sm:$0xff]
  %v1937 = vld [vmem:[#allocation2 + $0x41] sm:$0xff]
  %v1938 = vld [vmem:[#allocation2 + $0x49] sm:$0xff]
  %v1939 = vld [vmem:[#allocation2 + $0x51] sm:$0xff]
  %v1940 = vpack.c.bf16 %v1932, %v1932
  %v1941 = vpack.c.bf16 %v1933, %v1933
  %v1942 = vpack.c.bf16 %v1934, %v1934
  %v1943 = vpack.c.bf16 %v1935, %v1935
  %v1944 = vpack.c.bf16 %v1936, %v1936
  %v1945 = vpack.c.bf16 %v1937, %v1937
  %v1946 = vpack.c.bf16 %v1938, %v1938
  %v1947 = vpack.c.bf16 %v1939, %v1939
  %1948 = vst [vmem:[#allocation3 + $0x18] sm:$0xf] %v1940
  %1949 = vst [vmem:[#allocation3 + $0x3c] sm:$0xf] %v1941
  %1950 = vst [vmem:[#allocation3 + $0x60] sm:$0xf] %v1942
  %1951 = vst [vmem:[#allocation3 + $0x84] sm:$0xf] %v1943
  %1952 = vst [vmem:[#allocation3 + $0xa8] sm:$0xf] %v1944
  %1953 = vst [vmem:[#allocation3 + $0xcc] sm:$0xf] %v1945
  %1954 = vst [vmem:[#allocation3 + $0xf0] sm:$0xf] %v1946
  %1955 = vst [vmem:[#allocation3 + $0x114] sm:$0xf] %v1947
  %v1956 = vld [vmem:[#allocation2 + $0x1a] sm:$0xff]
  %v1957 = vld [vmem:[#allocation2 + $0x22] sm:$0xff]
  %v1958 = vld [vmem:[#allocation2 + $0x2a] sm:$0xff]
  %v1959 = vld [vmem:[#allocation2 + $0x32] sm:$0xff]
  %v1960 = vld [vmem:[#allocation2 + $0x3a] sm:$0xff]
  %v1961 = vld [vmem:[#allocation2 + $0x42] sm:$0xff]
  %v1962 = vld [vmem:[#allocation2 + $0x4a] sm:$0xff]
  %v1963 = vld [vmem:[#allocation2 + $0x52] sm:$0xff]
  %v1964 = vpack.c.bf16 %v1956, %v1956
  %v1965 = vpack.c.bf16 %v1957, %v1957
  %v1966 = vpack.c.bf16 %v1958, %v1958
  %v1967 = vpack.c.bf16 %v1959, %v1959
  %v1968 = vpack.c.bf16 %v1960, %v1960
  %v1969 = vpack.c.bf16 %v1961, %v1961
  %v1970 = vpack.c.bf16 %v1962, %v1962
  %v1971 = vpack.c.bf16 %v1963, %v1963
  %1972 = vst [vmem:[#allocation3 + $0x1c] sm:$0xf] %v1964
  %1973 = vst [vmem:[#allocation3 + $0x40] sm:$0xf] %v1965
  %1974 = vst [vmem:[#allocation3 + $0x64] sm:$0xf] %v1966
  %1975 = vst [vmem:[#allocation3 + $0x88] sm:$0xf] %v1967
  %1976 = vst [vmem:[#allocation3 + $0xac] sm:$0xf] %v1968
  %1977 = vst [vmem:[#allocation3 + $0xd0] sm:$0xf] %v1969
  %1978 = vst [vmem:[#allocation3 + $0xf4] sm:$0xf] %v1970
  %1979 = vst [vmem:[#allocation3 + $0x118] sm:$0xf] %v1971
  %v1980 = vld [vmem:[#allocation2 + $0x1b] sm:$0xff]
  %v1981 = vld [vmem:[#allocation2 + $0x23] sm:$0xff]
  %v1982 = vld [vmem:[#allocation2 + $0x2b] sm:$0xff]
  %v1983 = vld [vmem:[#allocation2 + $0x33] sm:$0xff]
  %v1984 = vld [vmem:[#allocation2 + $0x3b] sm:$0xff]
  %v1985 = vld [vmem:[#allocation2 + $0x43] sm:$0xff]
  %v1986 = vld [vmem:[#allocation2 + $0x4b] sm:$0xff]
  %v1987 = vld [vmem:[#allocation2 + $0x53] sm:$0xff]
  %v1988 = vpack.c.bf16 %v1980, %v1980
  %v1989 = vpack.c.bf16 %v1981, %v1981
  %v1990 = vpack.c.bf16 %v1982, %v1982
  %v1991 = vpack.c.bf16 %v1983, %v1983
  %v1992 = vpack.c.bf16 %v1984, %v1984
  %v1993 = vpack.c.bf16 %v1985, %v1985
  %v1994 = vpack.c.bf16 %v1986, %v1986
  %v1995 = vpack.c.bf16 %v1987, %v1987
  %1996 = vst [vmem:[#allocation3 + $0x20] sm:$0xf] %v1988
  %1997 = vst [vmem:[#allocation3 + $0x44] sm:$0xf] %v1989
  %1998 = vst [vmem:[#allocation3 + $0x68] sm:$0xf] %v1990
  %1999 = vst [vmem:[#allocation3 + $0x8c] sm:$0xf] %v1991
  %2000 = vst [vmem:[#allocation3 + $0xb0] sm:$0xf] %v1992
  %2001 = vst [vmem:[#allocation3 + $0xd4] sm:$0xf] %v1993
  %2002 = vst [vmem:[#allocation3 + $0xf8] sm:$0xf] %v1994
  %2003 = vst [vmem:[#allocation3 + $0x11c] sm:$0xf] %v1995
  %v2004 = vld [vmem:[#allocation3] sm:$0xff]
  %v2005 = vld [vmem:[#allocation3 + $0x8] sm:$0xff]
  %v2006 = vld [vmem:[#allocation3 + $0x10] sm:$0xff]
  %v2007 = vld [vmem:[#allocation3 + $0x18] sm:$0xff]
  %v2008 = vld [vmem:[#allocation3 + $0x20] sm:$0xf]
  %v2009 = vld [vmem:[#allocation3 + $0x24] sm:$0xff]
  %v2010 = vld [vmem:[#allocation3 + $0x2c] sm:$0xff]
  %v2011 = vld [vmem:[#allocation3 + $0x34] sm:$0xff]
  %v2012 = vld [vmem:[#allocation3 + $0x3c] sm:$0xff]
  %v2013 = vld [vmem:[#allocation3 + $0x44] sm:$0xf]
  %v2014 = vld [vmem:[#allocation3 + $0x48] sm:$0xff]
  %v2015 = vld [vmem:[#allocation3 + $0x50] sm:$0xff]
  %v2016 = vld [vmem:[#allocation3 + $0x58] sm:$0xff]
  %v2017 = vld [vmem:[#allocation3 + $0x60] sm:$0xff]
  %v2018 = vld [vmem:[#allocation3 + $0x68] sm:$0xf]
  %v2019 = vld [vmem:[#allocation3 + $0x6c] sm:$0xff]
  %v2020 = vld [vmem:[#allocation3 + $0x74] sm:$0xff]
  %v2021 = vld [vmem:[#allocation3 + $0x7c] sm:$0xff]
  %v2022 = vld [vmem:[#allocation3 + $0x84] sm:$0xff]
  %v2023 = vld [vmem:[#allocation3 + $0x8c] sm:$0xf]
  %v2024 = vld [vmem:[#allocation3 + $0x90] sm:$0xff]
  %v2025 = vld [vmem:[#allocation3 + $0x98] sm:$0xff]
  %v2026 = vld [vmem:[#allocation3 + $0xa0] sm:$0xff]
  %v2027 = vld [vmem:[#allocation3 + $0xa8] sm:$0xff]
  %v2028 = vld [vmem:[#allocation3 + $0xb0] sm:$0xf]
  %v2029 = vld [vmem:[#allocation3 + $0xb4] sm:$0xff]
  %v2030 = vld [vmem:[#allocation3 + $0xbc] sm:$0xff]
  %v2031 = vld [vmem:[#allocation3 + $0xc4] sm:$0xff]
  %v2032 = vld [vmem:[#allocation3 + $0xcc] sm:$0xff]
  %v2033 = vld [vmem:[#allocation3 + $0xd4] sm:$0xf]
  %v2034 = vld [vmem:[#allocation3 + $0xd8] sm:$0xff]
  %v2035 = vld [vmem:[#allocation3 + $0xe0] sm:$0xff]
  %v2036 = vld [vmem:[#allocation3 + $0xe8] sm:$0xff]
  %v2037 = vld [vmem:[#allocation3 + $0xf0] sm:$0xff]
  %v2038 = vld [vmem:[#allocation3 + $0xf8] sm:$0xf]
  %v2039 = vld [vmem:[#allocation3 + $0xfc] sm:$0xff]
  %v2040 = vld [vmem:[#allocation3 + $0x104] sm:$0xff]
  %v2041 = vld [vmem:[#allocation3 + $0x10c] sm:$0xff]
  %v2042 = vld [vmem:[#allocation3 + $0x114] sm:$0xff]
  %v2043 = vld [vmem:[#allocation3 + $0x11c] sm:$0xf]
  %v2044 = vld [vmem:[%s6] sm:$0xf]
  %v2045 = vld [vmem:[%s6 + $0x4] sm:$0xf]
  %v2046 = vld [vmem:[%s6 + $0x8] sm:$0xf]
  %v2047 = vld [vmem:[%s6 + $0xc] sm:$0xf]
  %v2048 = vld [vmem:[%s6 + $0x10] sm:$0xf]
  %v2049 = vld [vmem:[%s6 + $0x14] sm:$0xf]
  %v2050 = vld [vmem:[%s6 + $0x18] sm:$0xf]
  %v2051 = vld [vmem:[%s6 + $0x1c] sm:$0xf]
  %v2052 = vld [vmem:[%s6 + $0x20] sm:$0xf]
  %v2053 = vld [vmem:[%s6 + $0x24] sm:$0xf]
  %v2054 = vld [vmem:[%s6 + $0x28] sm:$0xf]
  %v2055 = vld [vmem:[%s6 + $0x2c] sm:$0xf]
  %v2056 = vld [vmem:[%s6 + $0x30] sm:$0xf]
  %v2057 = vld [vmem:[%s6 + $0x34] sm:$0xf]
  %v2058 = vld [vmem:[%s6 + $0x38] sm:$0xf]
  %v2059 = vld [vmem:[%s6 + $0x3c] sm:$0xf]
  %v2060 = vld [vmem:[%s6 + $0x40] sm:$0xf]
  %v2061 = vld [vmem:[%s6 + $0x44] sm:$0xf]
  %v2062 = vld [vmem:[%s6 + $0x48] sm:$0xf]
  %v2063 = vld [vmem:[%s6 + $0x4c] sm:$0xf]
  %v2064 = vld [vmem:[%s6 + $0x50] sm:$0xf]
  %v2065 = vld [vmem:[%s6 + $0x54] sm:$0xf]
  %v2066 = vld [vmem:[%s6 + $0x58] sm:$0xf]
  %v2067 = vld [vmem:[%s6 + $0x5c] sm:$0xf]
  %v2068 = vld [vmem:[%s6 + $0x60] sm:$0xf]
  %v2069 = vld [vmem:[%s6 + $0x64] sm:$0xf]
  %v2070 = vld [vmem:[%s6 + $0x68] sm:$0xf]
  %v2071 = vld [vmem:[%s6 + $0x6c] sm:$0xf]
  %v2072 = vld [vmem:[%s6 + $0x70] sm:$0xf]
  %v2073 = vld [vmem:[%s6 + $0x74] sm:$0xf]
  %v2074 = vld [vmem:[%s6 + $0x78] sm:$0xf]
  %v2075 = vld [vmem:[%s6 + $0x7c] sm:$0xf]
  %v2076 = vld [vmem:[%s6 + $0x80] sm:$0xf]
  %v2077 = vld [vmem:[%s6 + $0x84] sm:$0xf]
  %v2078 = vld [vmem:[%s6 + $0x88] sm:$0xf]
  %v2079 = vld [vmem:[%s6 + $0x8c] sm:$0xf]
  %v2080 = vld [vmem:[%s6 + $0x90] sm:$0xf]
  %v2081 = vld [vmem:[%s6 + $0x94] sm:$0xf]
  %v2082 = vld [vmem:[%s6 + $0x98] sm:$0xf]
  %v2083 = vld [vmem:[%s6 + $0x9c] sm:$0xf]
  %v2084 = vld [vmem:[%s6 + $0xa0] sm:$0xf]
  %v2085 = vld [vmem:[%s6 + $0xa4] sm:$0xf]
  %v2086 = vld [vmem:[%s6 + $0xa8] sm:$0xf]
  %v2087 = vld [vmem:[%s6 + $0xac] sm:$0xf]
  %v2088 = vld [vmem:[%s6 + $0xb0] sm:$0xf]
  %v2089 = vld [vmem:[%s6 + $0xb4] sm:$0xf]
  %v2090 = vld [vmem:[%s6 + $0xb8] sm:$0xf]
  %v2091 = vld [vmem:[%s6 + $0xbc] sm:$0xf]
  %v2092 = vld [vmem:[%s6 + $0xc0] sm:$0xf]
  %v2093 = vld [vmem:[%s6 + $0xc4] sm:$0xf]
  %v2094 = vld [vmem:[%s6 + $0xc8] sm:$0xf]
  %v2095 = vld [vmem:[%s6 + $0xcc] sm:$0xf]
  %v2096 = vld [vmem:[%s6 + $0xd0] sm:$0xf]
  %v2097 = vld [vmem:[%s6 + $0xd4] sm:$0xf]
  %v2098 = vld [vmem:[%s6 + $0xd8] sm:$0xf]
  %v2099 = vld [vmem:[%s6 + $0xdc] sm:$0xf]
  %v2100 = vld [vmem:[%s6 + $0xe0] sm:$0xf]
  %v2101 = vld [vmem:[%s6 + $0xe4] sm:$0xf]
  %v2102 = vld [vmem:[%s6 + $0xe8] sm:$0xf]
  %v2103 = vld [vmem:[%s6 + $0xec] sm:$0xf]
  %v2104 = vld [vmem:[%s6 + $0xf0] sm:$0xf]
  %v2105 = vld [vmem:[%s6 + $0xf4] sm:$0xf]
  %v2106 = vld [vmem:[%s6 + $0xf8] sm:$0xf]
  %v2107 = vld [vmem:[%s6 + $0xfc] sm:$0xf]
  %v2108 = vld [vmem:[%s6 + $0x100] sm:$0xf]
  %v2109 = vld [vmem:[%s6 + $0x104] sm:$0xf]
  %v2110 = vld [vmem:[%s6 + $0x108] sm:$0xf]
  %v2111 = vld [vmem:[%s6 + $0x10c] sm:$0xf]
  %v2112 = vld [vmem:[%s6 + $0x110] sm:$0xf]
  %v2113 = vld [vmem:[%s6 + $0x114] sm:$0xf]
  %v2114 = vld [vmem:[%s6 + $0x118] sm:$0xf]
  %v2115 = vld [vmem:[%s6 + $0x11c] sm:$0xf]
  %v2116 = vld [vmem:[%s6 + $0x120] sm:$0xf]
  %v2117 = vld [vmem:[%s6 + $0x124] sm:$0xf]
  %v2118 = vld [vmem:[%s6 + $0x128] sm:$0xf]
  %v2119 = vld [vmem:[%s6 + $0x12c] sm:$0xf]
  %v2120 = vld [vmem:[%s6 + $0x130] sm:$0xf]
  %v2121 = vld [vmem:[%s6 + $0x134] sm:$0xf]
  %v2122 = vld [vmem:[%s6 + $0x138] sm:$0xf]
  %v2123 = vld [vmem:[%s6 + $0x13c] sm:$0xf]
  %v2124 = vld [vmem:[%s6 + $0x140] sm:$0xf]
  %v2125 = vld [vmem:[%s6 + $0x144] sm:$0xf]
  %v2126 = vld [vmem:[%s6 + $0x148] sm:$0xf]
  %v2127 = vld [vmem:[%s6 + $0x14c] sm:$0xf]
  %v2128 = vld [vmem:[%s6 + $0x150] sm:$0xf]
  %v2129 = vld [vmem:[%s6 + $0x154] sm:$0xf]
  %v2130 = vld [vmem:[%s6 + $0x158] sm:$0xf]
  %v2131 = vld [vmem:[%s6 + $0x15c] sm:$0xf]
  %v2132 = vld [vmem:[%s6 + $0x160] sm:$0xf]
  %v2133 = vld [vmem:[%s6 + $0x164] sm:$0xf]
  %v2134 = vld [vmem:[%s6 + $0x168] sm:$0xf]
  %v2135 = vld [vmem:[%s6 + $0x16c] sm:$0xf]
  %v2136 = vld [vmem:[%s6 + $0x170] sm:$0xf]
  %v2137 = vld [vmem:[%s6 + $0x174] sm:$0xf]
  %v2138 = vld [vmem:[%s6 + $0x178] sm:$0xf]
  %v2139 = vld [vmem:[%s6 + $0x17c] sm:$0xf]
  %v2140 = vld [vmem:[%s6 + $0x180] sm:$0xf]
  %v2141 = vld [vmem:[%s6 + $0x184] sm:$0xf]
  %v2142 = vld [vmem:[%s6 + $0x188] sm:$0xf]
  %v2143 = vld [vmem:[%s6 + $0x18c] sm:$0xf]
  %v2144 = vld [vmem:[%s6 + $0x190] sm:$0xf]
  %v2145 = vld [vmem:[%s6 + $0x194] sm:$0xf]
  %v2146 = vld [vmem:[%s6 + $0x198] sm:$0xf]
  %v2147 = vld [vmem:[%s6 + $0x19c] sm:$0xf]
  %v2148 = vld [vmem:[%s6 + $0x1a0] sm:$0xf]
  %v2149 = vld [vmem:[%s6 + $0x1a4] sm:$0xf]
  %v2150 = vld [vmem:[%s6 + $0x1a8] sm:$0xf]
  %v2151 = vld [vmem:[%s6 + $0x1ac] sm:$0xf]
  %v2152 = vld [vmem:[%s6 + $0x1b0] sm:$0xf]
  %v2153 = vld [vmem:[%s6 + $0x1b4] sm:$0xf]
  %v2154 = vld [vmem:[%s6 + $0x1b8] sm:$0xf]
  %v2155 = vld [vmem:[%s6 + $0x1bc] sm:$0xf]
  %v2156 = vld [vmem:[%s6 + $0x1c0] sm:$0xf]
  %v2157 = vld [vmem:[%s6 + $0x1c4] sm:$0xf]
  %v2158 = vld [vmem:[%s6 + $0x1c8] sm:$0xf]
  %v2159 = vld [vmem:[%s6 + $0x1cc] sm:$0xf]
  %v2160 = vld [vmem:[%s6 + $0x1d0] sm:$0xf]
  %v2161 = vld [vmem:[%s6 + $0x1d4] sm:$0xf]
  %v2162 = vld [vmem:[%s6 + $0x1d8] sm:$0xf]
  %v2163 = vld [vmem:[%s6 + $0x1dc] sm:$0xf]
  %v2164 = vld [vmem:[%s6 + $0x1e0] sm:$0xf]
  %v2165 = vld [vmem:[%s6 + $0x1e4] sm:$0xf]
  %v2166 = vld [vmem:[%s6 + $0x1e8] sm:$0xf]
  %v2167 = vld [vmem:[%s6 + $0x1ec] sm:$0xf]
  %v2168 = vld [vmem:[%s6 + $0x1f0] sm:$0xf]
  %v2169 = vld [vmem:[%s6 + $0x1f4] sm:$0xf]
  %v2170 = vld [vmem:[%s6 + $0x1f8] sm:$0xf]
  %v2171 = vld [vmem:[%s6 + $0x1fc] sm:$0xf]
  %v2172 = vld [vmem:[%s6 + $0x200] sm:$0xf]
  %v2173 = vld [vmem:[%s6 + $0x204] sm:$0xf]
  %v2174 = vld [vmem:[%s6 + $0x208] sm:$0xf]
  %v2175 = vld [vmem:[%s6 + $0x20c] sm:$0xf]
  %v2176 = vld [vmem:[%s6 + $0x210] sm:$0xf]
  %v2177 = vld [vmem:[%s6 + $0x214] sm:$0xf]
  %v2178 = vld [vmem:[%s6 + $0x218] sm:$0xf]
  %v2179 = vld [vmem:[%s6 + $0x21c] sm:$0xf]
  %v2180 = vld [vmem:[%s6 + $0x220] sm:$0xf]
  %v2181 = vld [vmem:[%s6 + $0x224] sm:$0xf]
  %v2182 = vld [vmem:[%s6 + $0x228] sm:$0xf]
  %v2183 = vld [vmem:[%s6 + $0x22c] sm:$0xf]
  %v2184 = vld [vmem:[%s6 + $0x230] sm:$0xf]
  %v2185 = vld [vmem:[%s6 + $0x234] sm:$0xf]
  %v2186 = vld [vmem:[%s6 + $0x238] sm:$0xf]
  %v2187 = vld [vmem:[%s6 + $0x23c] sm:$0xf]
  %v2228 = vunpack.c.l.b16 %v2004
  %v2229 = vunpack.c.h.b16 %v2004
  %v2230 = vunpack.c.l.b16 %v2005
  %v2231 = vunpack.c.h.b16 %v2005
  %v2232 = vunpack.c.l.b16 %v2006
  %v2233 = vunpack.c.h.b16 %v2006
  %v2234 = vunpack.c.l.b16 %v2007
  %v2235 = vunpack.c.h.b16 %v2007
  %v2236 = vunpack.c.l.b16 %v2008
  %v2237 = vunpack.c.l.b16 %v2009
  %v2238 = vunpack.c.h.b16 %v2009
  %v2239 = vunpack.c.l.b16 %v2010
  %v2240 = vunpack.c.h.b16 %v2010
  %v2241 = vunpack.c.l.b16 %v2011
  %v2242 = vunpack.c.h.b16 %v2011
  %v2243 = vunpack.c.l.b16 %v2012
  %v2244 = vunpack.c.h.b16 %v2012
  %v2245 = vunpack.c.l.b16 %v2013
  %v2246 = vunpack.c.l.b16 %v2014
  %v2247 = vunpack.c.h.b16 %v2014
  %v2248 = vunpack.c.l.b16 %v2015
  %v2249 = vunpack.c.h.b16 %v2015
  %v2250 = vunpack.c.l.b16 %v2016
  %v2251 = vunpack.c.h.b16 %v2016
  %v2252 = vunpack.c.l.b16 %v2017
  %v2253 = vunpack.c.h.b16 %v2017
  %v2254 = vunpack.c.l.b16 %v2018
  %v2255 = vunpack.c.l.b16 %v2019
  %v2256 = vunpack.c.h.b16 %v2019
  %v2257 = vunpack.c.l.b16 %v2020
  %v2258 = vunpack.c.h.b16 %v2020
  %v2259 = vunpack.c.l.b16 %v2021
  %v2260 = vunpack.c.h.b16 %v2021
  %v2261 = vunpack.c.l.b16 %v2022
  %v2262 = vunpack.c.h.b16 %v2022
  %v2263 = vunpack.c.l.b16 %v2023
  %v2264 = vunpack.c.l.b16 %v2024
  %v2265 = vunpack.c.h.b16 %v2024
  %v2266 = vunpack.c.l.b16 %v2025
  %v2267 = vunpack.c.h.b16 %v2025
  %v2268 = vunpack.c.l.b16 %v2026
  %v2269 = vunpack.c.h.b16 %v2026
  %v2270 = vunpack.c.l.b16 %v2027
  %v2271 = vunpack.c.h.b16 %v2027
  %v2272 = vunpack.c.l.b16 %v2028
  %v2273 = vunpack.c.l.b16 %v2029
  %v2274 = vunpack.c.h.b16 %v2029
  %v2275 = vunpack.c.l.b16 %v2030
  %v2276 = vunpack.c.h.b16 %v2030
  %v2277 = vunpack.c.l.b16 %v2031
  %v2278 = vunpack.c.h.b16 %v2031
  %v2279 = vunpack.c.l.b16 %v2032
  %v2280 = vunpack.c.h.b16 %v2032
  %v2281 = vunpack.c.l.b16 %v2033
  %v2282 = vunpack.c.l.b16 %v2034
  %v2283 = vunpack.c.h.b16 %v2034
  %v2284 = vunpack.c.l.b16 %v2035
  %v2285 = vunpack.c.h.b16 %v2035
  %v2286 = vunpack.c.l.b16 %v2036
  %v2287 = vunpack.c.h.b16 %v2036
  %v2288 = vunpack.c.l.b16 %v2037
  %v2289 = vunpack.c.h.b16 %v2037
  %v2290 = vunpack.c.l.b16 %v2038
  %v2291 = vunpack.c.l.b16 %v2039
  %v2292 = vunpack.c.h.b16 %v2039
  %v2293 = vunpack.c.l.b16 %v2040
  %v2294 = vunpack.c.h.b16 %v2040
  %v2295 = vunpack.c.l.b16 %v2041
  %v2296 = vunpack.c.h.b16 %v2041
  %v2297 = vunpack.c.l.b16 %v2042
  %v2298 = vunpack.c.h.b16 %v2042
  %v2299 = vunpack.c.l.b16 %v2043
  %v2300 = vpack.c.b16 %v2237, %v2228
  %v2301 = vpack.c.b16 %v2238, %v2229
  %v2302 = vpack.c.b16 %v2239, %v2230
  %v2303 = vpack.c.b16 %v2240, %v2231
  %v2304 = vpack.c.b16 %v2241, %v2232
  %v2305 = vpack.c.b16 %v2242, %v2233
  %v2306 = vpack.c.b16 %v2243, %v2234
  %v2307 = vpack.c.b16 %v2244, %v2235
  %v2308 = vpack.c.b16 %v2245, %v2236
  %v2309 = vpack.c.b16 %v2255, %v2246
  %v2310 = vpack.c.b16 %v2256, %v2247
  %v2311 = vpack.c.b16 %v2257, %v2248
  %v2312 = vpack.c.b16 %v2258, %v2249
  %v2313 = vpack.c.b16 %v2259, %v2250
  %v2314 = vpack.c.b16 %v2260, %v2251
  %v2315 = vpack.c.b16 %v2261, %v2252
  %v2316 = vpack.c.b16 %v2262, %v2253
  %v2317 = vpack.c.b16 %v2263, %v2254
  %v2318 = vpack.c.b16 %v2273, %v2264
  %v2319 = vpack.c.b16 %v2274, %v2265
  %v2320 = vpack.c.b16 %v2275, %v2266
  %v2321 = vpack.c.b16 %v2276, %v2267
  %v2322 = vpack.c.b16 %v2277, %v2268
  %v2323 = vpack.c.b16 %v2278, %v2269
  %v2324 = vpack.c.b16 %v2279, %v2270
  %v2325 = vpack.c.b16 %v2280, %v2271
  %v2326 = vpack.c.b16 %v2281, %v2272
  %v2327 = vpack.c.b16 %v2291, %v2282
  %v2328 = vpack.c.b16 %v2292, %v2283
  %v2329 = vpack.c.b16 %v2293, %v2284
  %v2330 = vpack.c.b16 %v2294, %v2285
  %v2331 = vpack.c.b16 %v2295, %v2286
  %v2332 = vpack.c.b16 %v2296, %v2287
  %v2333 = vpack.c.b16 %v2297, %v2288
  %v2334 = vpack.c.b16 %v2298, %v2289
  %v2335 = vpack.c.b16 %v2299, %v2290
  %v2516 = vunpack.c.l.b16 %v2044
  %v2517 = vunpack.c.l.b16 %v2045
  %v2518 = vunpack.c.l.b16 %v2046
  %v2519 = vunpack.c.l.b16 %v2047
  %v2520 = vunpack.c.l.b16 %v2048
  %v2521 = vunpack.c.l.b16 %v2049
  %v2522 = vunpack.c.l.b16 %v2050
  %v2523 = vunpack.c.l.b16 %v2051
  %v2524 = vunpack.c.l.b16 %v2052
  %v2525 = vunpack.c.l.b16 %v2053
  %v2526 = vunpack.c.l.b16 %v2054
  %v2527 = vunpack.c.l.b16 %v2055
  %v2528 = vunpack.c.l.b16 %v2056
  %v2529 = vunpack.c.l.b16 %v2057
  %v2530 = vunpack.c.l.b16 %v2058
  %v2531 = vunpack.c.l.b16 %v2059
  %v2532 = vunpack.c.l.b16 %v2060
  %v2533 = vunpack.c.l.b16 %v2061
  %v2534 = vunpack.c.l.b16 %v2062
  %v2535 = vunpack.c.l.b16 %v2063
  %v2536 = vunpack.c.l.b16 %v2064
  %v2537 = vunpack.c.l.b16 %v2065
  %v2538 = vunpack.c.l.b16 %v2066
  %v2539 = vunpack.c.l.b16 %v2067
  %v2540 = vunpack.c.l.b16 %v2068
  %v2541 = vunpack.c.l.b16 %v2069
  %v2542 = vunpack.c.l.b16 %v2070
  %v2543 = vunpack.c.l.b16 %v2071
  %v2544 = vunpack.c.l.b16 %v2072
  %v2545 = vunpack.c.l.b16 %v2073
  %v2546 = vunpack.c.l.b16 %v2074
  %v2547 = vunpack.c.l.b16 %v2075
  %v2548 = vunpack.c.l.b16 %v2076
  %v2549 = vunpack.c.l.b16 %v2077
  %v2550 = vunpack.c.l.b16 %v2078
  %v2551 = vunpack.c.l.b16 %v2079
  %v2552 = vunpack.c.l.b16 %v2080
  %v2553 = vunpack.c.l.b16 %v2081
  %v2554 = vunpack.c.l.b16 %v2082
  %v2555 = vunpack.c.l.b16 %v2083
  %v2556 = vunpack.c.l.b16 %v2084
  %v2557 = vunpack.c.l.b16 %v2085
  %v2558 = vunpack.c.l.b16 %v2086
  %v2559 = vunpack.c.l.b16 %v2087
  %v2560 = vunpack.c.l.b16 %v2088
  %v2561 = vunpack.c.l.b16 %v2089
  %v2562 = vunpack.c.l.b16 %v2090
  %v2563 = vunpack.c.l.b16 %v2091
  %v2564 = vunpack.c.l.b16 %v2092
  %v2565 = vunpack.c.l.b16 %v2093
  %v2566 = vunpack.c.l.b16 %v2094
  %v2567 = vunpack.c.l.b16 %v2095
  %v2568 = vunpack.c.l.b16 %v2096
  %v2569 = vunpack.c.l.b16 %v2097
  %v2570 = vunpack.c.l.b16 %v2098
  %v2571 = vunpack.c.l.b16 %v2099
  %v2572 = vunpack.c.l.b16 %v2100
  %v2573 = vunpack.c.l.b16 %v2101
  %v2574 = vunpack.c.l.b16 %v2102
  %v2575 = vunpack.c.l.b16 %v2103
  %v2576 = vunpack.c.l.b16 %v2104
  %v2577 = vunpack.c.l.b16 %v2105
  %v2578 = vunpack.c.l.b16 %v2106
  %v2579 = vunpack.c.l.b16 %v2107
  %v2580 = vunpack.c.l.b16 %v2108
  %v2581 = vunpack.c.l.b16 %v2109
  %v2582 = vunpack.c.l.b16 %v2110
  %v2583 = vunpack.c.l.b16 %v2111
  %v2584 = vunpack.c.l.b16 %v2112
  %v2585 = vunpack.c.l.b16 %v2113
  %v2586 = vunpack.c.l.b16 %v2114
  %v2587 = vunpack.c.l.b16 %v2115
  %v2588 = vunpack.c.l.b16 %v2116
  %v2589 = vunpack.c.l.b16 %v2117
  %v2590 = vunpack.c.l.b16 %v2118
  %v2591 = vunpack.c.l.b16 %v2119
  %v2592 = vunpack.c.l.b16 %v2120
  %v2593 = vunpack.c.l.b16 %v2121
  %v2594 = vunpack.c.l.b16 %v2122
  %v2595 = vunpack.c.l.b16 %v2123
  %v2596 = vunpack.c.l.b16 %v2124
  %v2597 = vunpack.c.l.b16 %v2125
  %v2598 = vunpack.c.l.b16 %v2126
  %v2599 = vunpack.c.l.b16 %v2127
  %v2600 = vunpack.c.l.b16 %v2128
  %v2601 = vunpack.c.l.b16 %v2129
  %v2602 = vunpack.c.l.b16 %v2130
  %v2603 = vunpack.c.l.b16 %v2131
  %v2604 = vunpack.c.l.b16 %v2132
  %v2605 = vunpack.c.l.b16 %v2133
  %v2606 = vunpack.c.l.b16 %v2134
  %v2607 = vunpack.c.l.b16 %v2135
  %v2608 = vunpack.c.l.b16 %v2136
  %v2609 = vunpack.c.l.b16 %v2137
  %v2610 = vunpack.c.l.b16 %v2138
  %v2611 = vunpack.c.l.b16 %v2139
  %v2612 = vunpack.c.l.b16 %v2140
  %v2613 = vunpack.c.l.b16 %v2141
  %v2614 = vunpack.c.l.b16 %v2142
  %v2615 = vunpack.c.l.b16 %v2143
  %v2616 = vunpack.c.l.b16 %v2144
  %v2617 = vunpack.c.l.b16 %v2145
  %v2618 = vunpack.c.l.b16 %v2146
  %v2619 = vunpack.c.l.b16 %v2147
  %v2620 = vunpack.c.l.b16 %v2148
  %v2621 = vunpack.c.l.b16 %v2149
  %v2622 = vunpack.c.l.b16 %v2150
  %v2623 = vunpack.c.l.b16 %v2151
  %v2624 = vunpack.c.l.b16 %v2152
  %v2625 = vunpack.c.l.b16 %v2153
  %v2626 = vunpack.c.l.b16 %v2154
  %v2627 = vunpack.c.l.b16 %v2155
  %v2628 = vunpack.c.l.b16 %v2156
  %v2629 = vunpack.c.l.b16 %v2157
  %v2630 = vunpack.c.l.b16 %v2158
  %v2631 = vunpack.c.l.b16 %v2159
  %v2632 = vunpack.c.l.b16 %v2160
  %v2633 = vunpack.c.l.b16 %v2161
  %v2634 = vunpack.c.l.b16 %v2162
  %v2635 = vunpack.c.l.b16 %v2163
  %v2636 = vunpack.c.l.b16 %v2164
  %v2637 = vunpack.c.l.b16 %v2165
  %v2638 = vunpack.c.l.b16 %v2166
  %v2639 = vunpack.c.l.b16 %v2167
  %v2640 = vunpack.c.l.b16 %v2168
  %v2641 = vunpack.c.l.b16 %v2169
  %v2642 = vunpack.c.l.b16 %v2170
  %v2643 = vunpack.c.l.b16 %v2171
  %v2644 = vunpack.c.l.b16 %v2172
  %v2645 = vunpack.c.l.b16 %v2173
  %v2646 = vunpack.c.l.b16 %v2174
  %v2647 = vunpack.c.l.b16 %v2175
  %v2648 = vunpack.c.l.b16 %v2176
  %v2649 = vunpack.c.l.b16 %v2177
  %v2650 = vunpack.c.l.b16 %v2178
  %v2651 = vunpack.c.l.b16 %v2179
  %v2652 = vunpack.c.l.b16 %v2180
  %v2653 = vunpack.c.l.b16 %v2181
  %v2654 = vunpack.c.l.b16 %v2182
  %v2655 = vunpack.c.l.b16 %v2183
  %v2656 = vunpack.c.l.b16 %v2184
  %v2657 = vunpack.c.l.b16 %v2185
  %v2658 = vunpack.c.l.b16 %v2186
  %v2659 = vunpack.c.l.b16 %v2187
  %v2660 = vpack.c.b16 %v2517, %v2516
  %v2661 = vpack.c.b16 %v2519, %v2518
  %v2662 = vpack.c.b16 %v2521, %v2520
  %v2663 = vpack.c.b16 %v2523, %v2522
  %v2664 = vpack.c.b16 %v2525, %v2524
  %v2665 = vpack.c.b16 %v2527, %v2526
  %v2666 = vpack.c.b16 %v2529, %v2528
  %v2667 = vpack.c.b16 %v2531, %v2530
  %v2668 = vpack.c.b16 %v2533, %v2532
  %v2669 = vpack.c.b16 %v2535, %v2534
  %v2670 = vpack.c.b16 %v2537, %v2536
  %v2671 = vpack.c.b16 %v2539, %v2538
  %v2672 = vpack.c.b16 %v2541, %v2540
  %v2673 = vpack.c.b16 %v2543, %v2542
  %v2674 = vpack.c.b16 %v2545, %v2544
  %v2675 = vpack.c.b16 %v2547, %v2546
  %v2676 = vpack.c.b16 %v2549, %v2548
  %v2677 = vpack.c.b16 %v2551, %v2550
  %v2678 = vpack.c.b16 %v2553, %v2552
  %v2679 = vpack.c.b16 %v2555, %v2554
  %v2680 = vpack.c.b16 %v2557, %v2556
  %v2681 = vpack.c.b16 %v2559, %v2558
  %v2682 = vpack.c.b16 %v2561, %v2560
  %v2683 = vpack.c.b16 %v2563, %v2562
  %v2684 = vpack.c.b16 %v2565, %v2564
  %v2685 = vpack.c.b16 %v2567, %v2566
  %v2686 = vpack.c.b16 %v2569, %v2568
  %v2687 = vpack.c.b16 %v2571, %v2570
  %v2688 = vpack.c.b16 %v2573, %v2572
  %v2689 = vpack.c.b16 %v2575, %v2574
  %v2690 = vpack.c.b16 %v2577, %v2576
  %v2691 = vpack.c.b16 %v2579, %v2578
  %v2692 = vpack.c.b16 %v2581, %v2580
  %v2693 = vpack.c.b16 %v2583, %v2582
  %v2694 = vpack.c.b16 %v2585, %v2584
  %v2695 = vpack.c.b16 %v2587, %v2586
  %v2696 = vpack.c.b16 %v2589, %v2588
  %v2697 = vpack.c.b16 %v2591, %v2590
  %v2698 = vpack.c.b16 %v2593, %v2592
  %v2699 = vpack.c.b16 %v2595, %v2594
  %v2700 = vpack.c.b16 %v2597, %v2596
  %v2701 = vpack.c.b16 %v2599, %v2598
  %v2702 = vpack.c.b16 %v2601, %v2600
  %v2703 = vpack.c.b16 %v2603, %v2602
  %v2704 = vpack.c.b16 %v2605, %v2604
  %v2705 = vpack.c.b16 %v2607, %v2606
  %v2706 = vpack.c.b16 %v2609, %v2608
  %v2707 = vpack.c.b16 %v2611, %v2610
  %v2708 = vpack.c.b16 %v2613, %v2612
  %v2709 = vpack.c.b16 %v2615, %v2614
  %v2710 = vpack.c.b16 %v2617, %v2616
  %v2711 = vpack.c.b16 %v2619, %v2618
  %v2712 = vpack.c.b16 %v2621, %v2620
  %v2713 = vpack.c.b16 %v2623, %v2622
  %v2714 = vpack.c.b16 %v2625, %v2624
  %v2715 = vpack.c.b16 %v2627, %v2626
  %v2716 = vpack.c.b16 %v2629, %v2628
  %v2717 = vpack.c.b16 %v2631, %v2630
  %v2718 = vpack.c.b16 %v2633, %v2632
  %v2719 = vpack.c.b16 %v2635, %v2634
  %v2720 = vpack.c.b16 %v2637, %v2636
  %v2721 = vpack.c.b16 %v2639, %v2638
  %v2722 = vpack.c.b16 %v2641, %v2640
  %v2723 = vpack.c.b16 %v2643, %v2642
  %v2724 = vpack.c.b16 %v2645, %v2644
  %v2725 = vpack.c.b16 %v2647, %v2646
  %v2726 = vpack.c.b16 %v2649, %v2648
  %v2727 = vpack.c.b16 %v2651, %v2650
  %v2728 = vpack.c.b16 %v2653, %v2652
  %v2729 = vpack.c.b16 %v2655, %v2654
  %v2730 = vpack.c.b16 %v2657, %v2656
  %v2731 = vpack.c.b16 %v2659, %v2658
  %2804 = vmatpush.bf16.msra.mxu0 %v2667
  %2805 = vmatpush.bf16.msra.mxu0 %v2666
  %2806 = vmatpush.bf16.msra.mxu0 %v2665
  %2807 = vmatpush.bf16.msra.mxu0 %v2664
  %2808 = vmatpush.bf16.msra.mxu0 %v2663
  %2809 = vmatpush.bf16.msra.mxu0 %v2662
  %2810 = vmatpush.bf16.msra.mxu0 %v2661
  %2811 = vmatpush.bf16.msra.mxu0 %v2660
  %2812 = vmatmul.bf16.gmra.mxu0 %v2300
  %v2813 = vpop.f32.mrf.mxu0
  %v2814 = vadd.f32 0.0, %v2813
  %v2815 = vpop.f32.mrf.mxu0
  %v2816 = vadd.f32 0.0, %v2815
  %2817 = vmatmul.bf16.gmra.mxu0 %v2309
  %v2818 = vpop.f32.mrf.mxu0
  %v2819 = vadd.f32 0.0, %v2818
  %v2820 = vpop.f32.mrf.mxu0
  %v2821 = vadd.f32 0.0, %v2820
  %2822 = vmatmul.bf16.gmra.mxu0 %v2318
  %v2823 = vpop.f32.mrf.mxu0
  %v2824 = vadd.f32 0.0, %v2823
  %v2825 = vpop.f32.mrf.mxu0
  %v2826 = vadd.f32 0.0, %v2825
  %2827 = vmatmul.bf16.gmra.mxu0 %v2327
  %v2828 = vpop.f32.mrf.mxu0
  %v2829 = vadd.f32 0.0, %v2828
  %v2830 = vpop.f32.mrf.mxu0
  %v2831 = vadd.f32 0.0, %v2830
  %2832 = vdwg.mxu0
  %2833 = vmatpush.bf16.msra.mxu0 %v2675
  %2834 = vmatpush.bf16.msra.mxu0 %v2674
  %2835 = vmatpush.bf16.msra.mxu0 %v2673
  %2836 = vmatpush.bf16.msra.mxu0 %v2672
  %2837 = vmatpush.bf16.msra.mxu0 %v2671
  %2838 = vmatpush.bf16.msra.mxu0 %v2670
  %2839 = vmatpush.bf16.msra.mxu0 %v2669
  %2840 = vmatpush.bf16.msra.mxu0 %v2668
  %2841 = vmatmul.bf16.gmra.mxu0 %v2301
  %v2842 = vpop.f32.mrf.mxu0
  %v2843 = vadd.f32 %v2814, %v2842
  %v2844 = vpop.f32.mrf.mxu0
  %v2845 = vadd.f32 %v2816, %v2844
  %2846 = vmatmul.bf16.gmra.mxu0 %v2310
  %v2847 = vpop.f32.mrf.mxu0
  %v2848 = vadd.f32 %v2819, %v2847
  %v2849 = vpop.f32.mrf.mxu0
  %v2850 = vadd.f32 %v2821, %v2849
  %2851 = vmatmul.bf16.gmra.mxu0 %v2319
  %v2852 = vpop.f32.mrf.mxu0
  %v2853 = vadd.f32 %v2824, %v2852
  %v2854 = vpop.f32.mrf.mxu0
  %v2855 = vadd.f32 %v2826, %v2854
  %2856 = vmatmul.bf16.gmra.mxu0 %v2328
  %v2857 = vpop.f32.mrf.mxu0
  %v2858 = vadd.f32 %v2829, %v2857
  %v2859 = vpop.f32.mrf.mxu0
  %v2860 = vadd.f32 %v2831, %v2859
  %2861 = vdwg.mxu0
  %2862 = vmatpush.bf16.msra.mxu0 %v2683
  %2863 = vmatpush.bf16.msra.mxu0 %v2682
  %2864 = vmatpush.bf16.msra.mxu0 %v2681
  %2865 = vmatpush.bf16.msra.mxu0 %v2680
  %2866 = vmatpush.bf16.msra.mxu0 %v2679
  %2867 = vmatpush.bf16.msra.mxu0 %v2678
  %2868 = vmatpush.bf16.msra.mxu0 %v2677
  %2869 = vmatpush.bf16.msra.mxu0 %v2676
  %2870 = vmatmul.bf16.gmra.mxu0 %v2302
  %v2871 = vpop.f32.mrf.mxu0
  %v2872 = vadd.f32 %v2843, %v2871
  %v2873 = vpop.f32.mrf.mxu0
  %v2874 = vadd.f32 %v2845, %v2873
  %2875 = vmatmul.bf16.gmra.mxu0 %v2311
  %v2876 = vpop.f32.mrf.mxu0
  %v2877 = vadd.f32 %v2848, %v2876
  %v2878 = vpop.f32.mrf.mxu0
  %v2879 = vadd.f32 %v2850, %v2878
  %2880 = vmatmul.bf16.gmra.mxu0 %v2320
  %v2881 = vpop.f32.mrf.mxu0
  %v2882 = vadd.f32 %v2853, %v2881
  %v2883 = vpop.f32.mrf.mxu0
  %v2884 = vadd.f32 %v2855, %v2883
  %2885 = vmatmul.bf16.gmra.mxu0 %v2329
  %v2886 = vpop.f32.mrf.mxu0
  %v2887 = vadd.f32 %v2858, %v2886
  %v2888 = vpop.f32.mrf.mxu0
  %v2889 = vadd.f32 %v2860, %v2888
  %2890 = vdwg.mxu0
  %2891 = vmatpush.bf16.msra.mxu0 %v2691
  %2892 = vmatpush.bf16.msra.mxu0 %v2690
  %2893 = vmatpush.bf16.msra.mxu0 %v2689
  %2894 = vmatpush.bf16.msra.mxu0 %v2688
  %2895 = vmatpush.bf16.msra.mxu0 %v2687
  %2896 = vmatpush.bf16.msra.mxu0 %v2686
  %2897 = vmatpush.bf16.msra.mxu0 %v2685
  %2898 = vmatpush.bf16.msra.mxu0 %v2684
  %2899 = vmatmul.bf16.gmra.mxu0 %v2303
  %v2900 = vpop.f32.mrf.mxu0
  %v2901 = vadd.f32 %v2872, %v2900
  %v2902 = vpop.f32.mrf.mxu0
  %v2903 = vadd.f32 %v2874, %v2902
  %2904 = vmatmul.bf16.gmra.mxu0 %v2312
  %v2905 = vpop.f32.mrf.mxu0
  %v2906 = vadd.f32 %v2877, %v2905
  %v2907 = vpop.f32.mrf.mxu0
  %v2908 = vadd.f32 %v2879, %v2907
  %2909 = vmatmul.bf16.gmra.mxu0 %v2321
  %v2910 = vpop.f32.mrf.mxu0
  %v2911 = vadd.f32 %v2882, %v2910
  %v2912 = vpop.f32.mrf.mxu0
  %v2913 = vadd.f32 %v2884, %v2912
  %2914 = vmatmul.bf16.gmra.mxu0 %v2330
  %v2915 = vpop.f32.mrf.mxu0
  %v2916 = vadd.f32 %v2887, %v2915
  %v2917 = vpop.f32.mrf.mxu0
  %v2918 = vadd.f32 %v2889, %v2917
  %2919 = vdwg.mxu0
  %2920 = vmatpush.bf16.msra.mxu0 %v2699
  %2921 = vmatpush.bf16.msra.mxu0 %v2698
  %2922 = vmatpush.bf16.msra.mxu0 %v2697
  %2923 = vmatpush.bf16.msra.mxu0 %v2696
  %2924 = vmatpush.bf16.msra.mxu0 %v2695
  %2925 = vmatpush.bf16.msra.mxu0 %v2694
  %2926 = vmatpush.bf16.msra.mxu0 %v2693
  %2927 = vmatpush.bf16.msra.mxu0 %v2692
  %2928 = vmatmul.bf16.gmra.mxu0 %v2304
  %v2929 = vpop.f32.mrf.mxu0
  %v2930 = vadd.f32 %v2901, %v2929
  %v2931 = vpop.f32.mrf.mxu0
  %v2932 = vadd.f32 %v2903, %v2931
  %2933 = vmatmul.bf16.gmra.mxu0 %v2313
  %v2934 = vpop.f32.mrf.mxu0
  %v2935 = vadd.f32 %v2906, %v2934
  %v2936 = vpop.f32.mrf.mxu0
  %v2937 = vadd.f32 %v2908, %v2936
  %2938 = vmatmul.bf16.gmra.mxu0 %v2322
  %v2939 = vpop.f32.mrf.mxu0
  %v2940 = vadd.f32 %v2911, %v2939
  %v2941 = vpop.f32.mrf.mxu0
  %v2942 = vadd.f32 %v2913, %v2941
  %2943 = vmatmul.bf16.gmra.mxu0 %v2331
  %v2944 = vpop.f32.mrf.mxu0
  %v2945 = vadd.f32 %v2916, %v2944
  %v2946 = vpop.f32.mrf.mxu0
  %v2947 = vadd.f32 %v2918, %v2946
  %2948 = vdwg.mxu0
  %2949 = vmatpush.bf16.msra.mxu0 %v2707
  %2950 = vmatpush.bf16.msra.mxu0 %v2706
  %2951 = vmatpush.bf16.msra.mxu0 %v2705
  %2952 = vmatpush.bf16.msra.mxu0 %v2704
  %2953 = vmatpush.bf16.msra.mxu0 %v2703
  %2954 = vmatpush.bf16.msra.mxu0 %v2702
  %2955 = vmatpush.bf16.msra.mxu0 %v2701
  %2956 = vmatpush.bf16.msra.mxu0 %v2700
  %2957 = vmatmul.bf16.gmra.mxu0 %v2305
  %v2958 = vpop.f32.mrf.mxu0
  %v2959 = vadd.f32 %v2930, %v2958
  %v2960 = vpop.f32.mrf.mxu0
  %v2961 = vadd.f32 %v2932, %v2960
  %2962 = vmatmul.bf16.gmra.mxu0 %v2314
  %v2963 = vpop.f32.mrf.mxu0
  %v2964 = vadd.f32 %v2935, %v2963
  %v2965 = vpop.f32.mrf.mxu0
  %v2966 = vadd.f32 %v2937, %v2965
  %2967 = vmatmul.bf16.gmra.mxu0 %v2323
  %v2968 = vpop.f32.mrf.mxu0
  %v2969 = vadd.f32 %v2940, %v2968
  %v2970 = vpop.f32.mrf.mxu0
  %v2971 = vadd.f32 %v2942, %v2970
  %2972 = vmatmul.bf16.gmra.mxu0 %v2332
  %v2973 = vpop.f32.mrf.mxu0
  %v2974 = vadd.f32 %v2945, %v2973
  %v2975 = vpop.f32.mrf.mxu0
  %v2976 = vadd.f32 %v2947, %v2975
  %2977 = vdwg.mxu0
  %2978 = vmatpush.bf16.msra.mxu0 %v2715
  %2979 = vmatpush.bf16.msra.mxu0 %v2714
  %2980 = vmatpush.bf16.msra.mxu0 %v2713
  %2981 = vmatpush.bf16.msra.mxu0 %v2712
  %2982 = vmatpush.bf16.msra.mxu0 %v2711
  %2983 = vmatpush.bf16.msra.mxu0 %v2710
  %2984 = vmatpush.bf16.msra.mxu0 %v2709
  %2985 = vmatpush.bf16.msra.mxu0 %v2708
  %2986 = vmatmul.bf16.gmra.mxu0 %v2306
  %v2987 = vpop.f32.mrf.mxu0
  %v2988 = vadd.f32 %v2959, %v2987
  %v2989 = vpop.f32.mrf.mxu0
  %v2990 = vadd.f32 %v2961, %v2989
  %2991 = vmatmul.bf16.gmra.mxu0 %v2315
  %v2992 = vpop.f32.mrf.mxu0
  %v2993 = vadd.f32 %v2964, %v2992
  %v2994 = vpop.f32.mrf.mxu0
  %v2995 = vadd.f32 %v2966, %v2994
  %2996 = vmatmul.bf16.gmra.mxu0 %v2324
  %v2997 = vpop.f32.mrf.mxu0
  %v2998 = vadd.f32 %v2969, %v2997
  %v2999 = vpop.f32.mrf.mxu0
  %v3000 = vadd.f32 %v2971, %v2999
  %3001 = vmatmul.bf16.gmra.mxu0 %v2333
  %v3002 = vpop.f32.mrf.mxu0
  %v3003 = vadd.f32 %v2974, %v3002
  %v3004 = vpop.f32.mrf.mxu0
  %v3005 = vadd.f32 %v2976, %v3004
  %3006 = vdwg.mxu0
  %3007 = vmatpush.bf16.msra.mxu0 %v2723
  %3008 = vmatpush.bf16.msra.mxu0 %v2722
  %3009 = vmatpush.bf16.msra.mxu0 %v2721
  %3010 = vmatpush.bf16.msra.mxu0 %v2720
  %3011 = vmatpush.bf16.msra.mxu0 %v2719
  %3012 = vmatpush.bf16.msra.mxu0 %v2718
  %3013 = vmatpush.bf16.msra.mxu0 %v2717
  %3014 = vmatpush.bf16.msra.mxu0 %v2716
  %3015 = vmatmul.bf16.gmra.mxu0 %v2307
  %v3016 = vpop.f32.mrf.mxu0
  %v3017 = vadd.f32 %v2988, %v3016
  %v3018 = vpop.f32.mrf.mxu0
  %v3019 = vadd.f32 %v2990, %v3018
  %3020 = vmatmul.bf16.gmra.mxu0 %v2316
  %v3021 = vpop.f32.mrf.mxu0
  %v3022 = vadd.f32 %v2993, %v3021
  %v3023 = vpop.f32.mrf.mxu0
  %v3024 = vadd.f32 %v2995, %v3023
  %3025 = vmatmul.bf16.gmra.mxu0 %v2325
  %v3026 = vpop.f32.mrf.mxu0
  %v3027 = vadd.f32 %v2998, %v3026
  %v3028 = vpop.f32.mrf.mxu0
  %v3029 = vadd.f32 %v3000, %v3028
  %3030 = vmatmul.bf16.gmra.mxu0 %v2334
  %v3031 = vpop.f32.mrf.mxu0
  %v3032 = vadd.f32 %v3003, %v3031
  %v3033 = vpop.f32.mrf.mxu0
  %v3034 = vadd.f32 %v3005, %v3033
  %3035 = vdwg.mxu0
  %3036 = vmatpush.bf16.msra.mxu0 %v2731
  %3037 = vmatpush.bf16.msra.mxu0 %v2730
  %3038 = vmatpush.bf16.msra.mxu0 %v2729
  %3039 = vmatpush.bf16.msra.mxu0 %v2728
  %3040 = vmatpush.bf16.msra.mxu0 %v2727
  %3041 = vmatpush.bf16.msra.mxu0 %v2726
  %3042 = vmatpush.bf16.msra.mxu0 %v2725
  %3043 = vmatpush.bf16.msra.mxu0 %v2724
  %3044 = vmatmul.bf16.gmra.mxu0 %v2308
  %v3045 = vpop.f32.mrf.mxu0
  %v3046 = vadd.f32 %v3017, %v3045
  %v3047 = vpop.f32.mrf.mxu0
  %v3048 = vadd.f32 %v3019, %v3047
  %3049 = vmatmul.bf16.gmra.mxu0 %v2317
  %v3050 = vpop.f32.mrf.mxu0
  %v3051 = vadd.f32 %v3022, %v3050
  %v3052 = vpop.f32.mrf.mxu0
  %v3053 = vadd.f32 %v3024, %v3052
  %3054 = vmatmul.bf16.gmra.mxu0 %v2326
  %v3055 = vpop.f32.mrf.mxu0
  %v3056 = vadd.f32 %v3027, %v3055
  %v3057 = vpop.f32.mrf.mxu0
  %v3058 = vadd.f32 %v3029, %v3057
  %3059 = vmatmul.bf16.gmra.mxu0 %v2335
  %v3060 = vpop.f32.mrf.mxu0
  %v3061 = vadd.f32 %v3032, %v3060
  %v3062 = vpop.f32.mrf.mxu0
  %v3063 = vadd.f32 %v3034, %v3062
  %3064 = vdwg.mxu0
  %vm3065 = vcmask 261120
  %3066 = vst.msk [vmem:[%s7] sm:$0xff] %vm3065, %v3046
  %3067 = vst.msk [vmem:[%s7 + $0x8] sm:$0xff] %vm3065, %v3048
  %3068 = vst.msk [vmem:[%s7 + $0x10] sm:$0xff] %vm3065, %v3051
  %3069 = vst.msk [vmem:[%s7 + $0x18] sm:$0xff] %vm3065, %v3053
  %3070 = vst.msk [vmem:[%s7 + $0x20] sm:$0xff] %vm3065, %v3056
  %3071 = vst.msk [vmem:[%s7 + $0x28] sm:$0xff] %vm3065, %v3058
  %3072 = vst.msk [vmem:[%s7 + $0x30] sm:$0xff] %vm3065, %v3061
  %3073 = vst.msk [vmem:[%s7 + $0x38] sm:$0xff] %vm3065, %v3063
  // Predicated region
  $region30: #{run_module.1} parent=0 // pred_check
    _
  $region31: #{run_module.1} parent=0 // pred_check_branch
    %3075 = sbr.rel (0) target = $region33
  $region32: #{run_module.1} parent=0 // pred_region
    _
  $region33: #{run_module.1} parent=0 // pred_fallthru
    _
  // Predicated region
  $region34: #{run_module.1} parent=0 // pred_check
    _
  $region35: #{run_module.1} parent=0 // pred_check_branch
    %3077 = sbr.rel (0) target = $region37
  $region36: #{run_module.1} parent=0 // pred_region
    _
  $region37: #{run_module.1} parent=0 // pred_fallthru
    _

</llo_original>
